<compile_context>
chip_gen: v6e
topology: v6e:2x2x1
jax: 0.10.0
libtpu: 0.0.40
codegen_flags: <defaults>
</compile_context>

<pallas_src>
import math

import jax
import jax.numpy as jnp
import numpy as np
from jax.experimental import pallas as pl
from jax.experimental.pallas import tpu as pltpu

FEATURE_SIZE = 64
INPUT_SIZE = 2 * FEATURE_SIZE  # 128
BN_EPS = 1e-5
LEAKY_SLOPE = 0.01
MXU_MIN_FAN_IN = 32  # layers with fan_in >= this use the MXU (bf16 inputs)
SLAB_LANES = 128


def _layer_dims(input_size):
    """Reproduce the while-loop in RelationHeadCone.__init__."""
    dims = []
    i = 1
    while input_size // (2 ** i) > 1:
        dims.append((input_size // (2 ** (i - 1)), input_size // (2 ** i)))
        i += 1
    out_dims = (input_size // (2 ** (i - 1)), 1)
    return dims, out_dims


def _round_up(x, m):
    return (x + m - 1) // m * m


HIDDEN_DIMS, OUT_DIMS = _layer_dims(INPUT_SIZE)   # 6 hidden layers + (2,1) out
WIDE_LAYERS = [l for l, (fin, _) in enumerate(HIDDEN_DIMS) if fin >= MXU_MIN_FAN_IN]
TAIL_LAYERS = [l for l, (fin, _) in enumerate(HIDDEN_DIMS) if fin < MXU_MIN_FAN_IN]

# ---- packed-parameter slab layouts (static, computed at import time) --------
# Wide (MXU) weight slab, stored bf16: W_l rows at 16-aligned offsets
# (bf16 sublane packing), lanes 0:fout.
W_WIDE_ROW_OFF = {}
_off = 0
for _l in WIDE_LAYERS:
    W_WIDE_ROW_OFF[_l] = _off
    _off += _round_up(HIDDEN_DIMS[_l][0], 16)
W_WIDE_ROWS = _round_up(_off, 16)          # 224

# Tail weight slab, stored f32: small layers + the 2->1 output layer.
W_TAIL_ROW_OFF = {}
_off = 0
for _l in TAIL_LAYERS:
    W_TAIL_ROW_OFF[_l] = _off
    _off += _round_up(HIDDEN_DIMS[_l][0], 8)
W_TAIL_ROW_OFF["out"] = _off
_off += _round_up(OUT_DIMS[0], 8)
W_TAIL_ROWS = _round_up(_off, 8)           # 40

# Vector slab (f32): gamma_l at row 2l, beta_l at row 2l+1, out-bias at 2*L.
OUT_BIAS_ROW = 2 * len(HIDDEN_DIMS)        # 12
V_SLAB_ROWS = _round_up(OUT_BIAS_ROW + 1, 8)   # 16


# ----------------------------- kernel ---------------------------------------
def _small_matvec(h, w_blk, fin):
    """[N, fin] x [fin, fout] as unrolled VPU broadcast-FMAs (no MXU)."""
    acc = h[:, 0:1] * w_blk[0:1, :]
    for k in range(1, fin):
        acc = acc + h[:, k:k + 1] * w_blk[k:k + 1, :]
    return acc


def _mlp_kernel(x_ref, w_wide_ref, w_tail_ref, v_ref, o_ref):
    h = x_ref[...].astype(jnp.float32)

    for l, (fin, fout) in enumerate(HIDDEN_DIMS):
        if fin >= MXU_MIN_FAN_IN:
            r0 = W_WIDE_ROW_OFF[l]
            w_blk = w_wide_ref[r0:r0 + fin, 0:fout]          # bf16 slab slice
            h = jnp.dot(h.astype(jnp.bfloat16), w_blk,
                        preferred_element_type=jnp.float32)
        else:
            r0 = W_TAIL_ROW_OFF[l]
            w_blk = w_tail_ref[r0:r0 + fin, 0:fout]          # f32 slab slice
            h = _small_matvec(h, w_blk, fin)
        # (hidden Linear bias omitted: exactly cancelled by BN mean subtraction)

        # BatchNorm1d, training mode (biased batch variance), 2-pass form with
        # gamma folded: only one [N,F] FMA touches the activations.
        m = jnp.mean(h, axis=0, keepdims=True)
        m2 = jnp.mean(h * h, axis=0, keepdims=True)
        var = jnp.maximum(m2 - m * m, 0.0)                   # guard cancellation
        gamma = v_ref[2 * l:2 * l + 1, 0:fout]
        beta = v_ref[2 * l + 1:2 * l + 2, 0:fout]
        scale = gamma * jax.lax.rsqrt(var + BN_EPS)          # [1, F], EUP rsqrt
        shift = beta - m * scale                             # [1, F]
        h = h * scale + shift
        # LeakyReLU(0.01) as max(h, 0.01*h)  (valid since 0 < slope < 1).
        h = jnp.maximum(h, LEAKY_SLOPE * h)

    # Final Linear 2 -> 1 (VPU FMAs) + bias, exact f32 weights.
    fin, fout = OUT_DIMS
    r0 = W_TAIL_ROW_OFF["out"]
    w_out = w_tail_ref[r0:r0 + fin, 0:fout]
    b_out = v_ref[OUT_BIAS_ROW:OUT_BIAS_ROW + 1, 0:fout]
    o_ref[...] = _small_matvec(h, w_out, fin) + b_out


def _vmem_limit_bytes(n):
    x_bytes = n * INPUT_SIZE * 4
    w_bytes = (W_WIDE_ROWS * SLAB_LANES * 2 +       # bf16 wide slab
               W_TAIL_ROWS * SLAB_LANES * 4 +       # f32 tail slab
               V_SLAB_ROWS * SLAB_LANES * 4)        # f32 vector slab
    out_bytes = n * 4
    # double-buffered blocks + generous headroom for in-kernel activations.
    need = 2 * (x_bytes + out_bytes + w_bytes) + 6 * x_bytes + (1 << 20)
    # Cap well under v7x's 64 MiB physical VMEM (halved vs v5e/v6e).
    return int(min(48 << 20, max(2 << 20, need)))


def relation_head_cone_forward(x, w_wide, w_tail, v_slab):
    """x: [N, 128] (single instance) or [G, N, 128] (G independent instances,
    each with its own BatchNorm batch statistics)."""
    squeeze = (x.ndim == 2)
    if squeeze:
        x = x[None]
    g, n, _ = x.shape

    out = pl.pallas_call(
        _mlp_kernel,
        out_shape=jax.ShapeDtypeStruct((g, n, 1), jnp.float32),
        grid_spec=pltpu.PrefetchScalarGridSpec(
            num_scalar_prefetch=0,
            grid=(g,),
            in_specs=[
                pl.BlockSpec((None, n, INPUT_SIZE), lambda i: (i, 0, 0)),
                # Parameter slabs: same block every step -> VMEM-resident.
                pl.BlockSpec((W_WIDE_ROWS, SLAB_LANES), lambda i: (0, 0)),
                pl.BlockSpec((W_TAIL_ROWS, SLAB_LANES), lambda i: (0, 0)),
                pl.BlockSpec((V_SLAB_ROWS, SLAB_LANES), lambda i: (0, 0)),
            ],
            out_specs=pl.BlockSpec((None, n, 1), lambda i: (i, 0, 0)),
        ),
        compiler_params=pltpu.CompilerParams(
            dimension_semantics=("parallel",),        # v7x: both TensorCores
            vmem_limit_bytes=_vmem_limit_bytes(n),
        ),
    )(x, w_wide, w_tail, v_slab)
    return out[0] if squeeze else out


# --------------------------- params & packing -------------------------------
def init_params(key):
    """Deterministic PyTorch-style init (kaiming-uniform weights, uniform
    biases, BN gamma=1 / beta=0), kept in PyTorch-faithful structure."""
    layers = []
    for fin, fout in HIDDEN_DIMS:
        key, kw, kb = jax.random.split(key, 3)
        bound = 1.0 / math.sqrt(fin)  # kaiming_uniform(a=sqrt(5)) -> 1/sqrt(fan_in)
        layers.append(dict(
            w=jax.random.uniform(kw, (fin, fout), jnp.float32, -bound, bound),
            b=jax.random.uniform(kb, (fout,), jnp.float32, -bound, bound),
            gamma=jnp.ones((fout,), jnp.float32),
            beta=jnp.zeros((fout,), jnp.float32),
        ))
    fin, fout = OUT_DIMS
    key, kw, kb = jax.random.split(key, 3)
    bound = 1.0 / math.sqrt(fin)
    w_out = jax.random.uniform(kw, (fin, fout), jnp.float32, -bound, bound)
    b_out = jax.random.uniform(kb, (fout,), jnp.float32, -bound, bound)
    return layers, w_out, b_out


def pack_params(layers, w_out, b_out):
    """Pack parameters into three lane-dense slabs: bf16 wide-layer weights,
    f32 tail weights, f32 gamma/beta/out-bias vectors.  Hidden Linear biases
    are intentionally NOT packed (training-mode BN cancels them exactly)."""
    w_wide = np.zeros((W_WIDE_ROWS, SLAB_LANES), np.float32)
    w_tail = np.zeros((W_TAIL_ROWS, SLAB_LANES), np.float32)
    v_slab = np.zeros((V_SLAB_ROWS, SLAB_LANES), np.float32)
    for l, ((fin, fout), layer) in enumerate(zip(HIDDEN_DIMS, layers)):
        if fin >= MXU_MIN_FAN_IN:
            r0 = W_WIDE_ROW_OFF[l]
            w_wide[r0:r0 + fin, 0:fout] = np.asarray(layer["w"])
        else:
            r0 = W_TAIL_ROW_OFF[l]
            w_tail[r0:r0 + fin, 0:fout] = np.asarray(layer["w"])
        v_slab[2 * l, 0:fout] = np.asarray(layer["gamma"])
        v_slab[2 * l + 1, 0:fout] = np.asarray(layer["beta"])
    fin, fout = OUT_DIMS
    r0 = W_TAIL_ROW_OFF["out"]
    w_tail[r0:r0 + fin, 0:fout] = np.asarray(w_out)
    v_slab[OUT_BIAS_ROW, 0:fout] = np.asarray(b_out)
    return (jnp.asarray(w_wide, dtype=jnp.bfloat16),
            jnp.asarray(w_tail, dtype=jnp.float32),
            jnp.asarray(v_slab, dtype=jnp.float32))


# --------------------------- references --------------------------------------
def reference_forward(x, layers, w_out, b_out):
    """PyTorch-faithful pure-f32 reference (hidden biases INCLUDED, centered
    BN, where-based LeakyReLU)."""
    h = x.astype(jnp.float32)
    for (fin, fout), layer in zip(HIDDEN_DIMS, layers):
        h = h @ layer["w"] + layer["b"]
        mean = jnp.mean(h, axis=0, keepdims=True)
        var = jnp.mean((h - mean) ** 2, axis=0, keepdims=True)
        h = layer["gamma"] * (h - mean) * jax.lax.rsqrt(var + BN_EPS) + layer["beta"]
        h = jnp.where(h > 0, h, LEAKY_SLOPE * h)
    return h @ w_out + b_out


def reference_forward_matched(x, layers, w_out, b_out):
    """Pure-JAX reference that mirrors the kernel's numerics (bf16 at the MXU
    boundary, bias elision, 2-pass BN, max-based LeakyReLU) to validate the
    kernel structure tightly."""
    h = x.astype(jnp.float32)
    for l, ((fin, fout), layer) in enumerate(zip(HIDDEN_DIMS, layers)):
        if fin >= MXU_MIN_FAN_IN:
            h = jnp.dot(h.astype(jnp.bfloat16),
                        layer["w"].astype(jnp.bfloat16),
                        preferred_element_type=jnp.float32)
        else:
            h = h @ layer["w"]
        m = jnp.mean(h, axis=0, keepdims=True)
        m2 = jnp.mean(h * h, axis=0, keepdims=True)
        var = jnp.maximum(m2 - m * m, 0.0)
        scale = layer["gamma"] * jax.lax.rsqrt(var + BN_EPS)
        shift = layer["beta"] - m * scale
        h = h * scale + shift
        h = jnp.maximum(h, LEAKY_SLOPE * h)
    return h @ w_out + b_out


if __name__ == "__main__":
    key = jax.random.PRNGKey(0)
    key, kx, kp = jax.random.split(key, 3)

    N = 16  # small batch (BatchNorm training mode needs N > 1)
    x = jax.random.normal(kx, (N, INPUT_SIZE), dtype=jnp.float32)

    layers, w_out, b_out = init_params(kp)
    w_wide, w_tail, v_slab = pack_params(layers, w_out, b_out)

    # Single-instance call ([N,128] -> [N,1]), same interface as module.forward.
    out = relation_head_cone_forward(x, w_wide, w_tail, v_slab)
    out = jax.block_until_ready(out)
    assert out.shape == (N, 1)

    # Strict check vs. a reference with the same bf16-at-MXU-boundary cast:
    # validates bias elision, gamma folding, 2-pass BN and the max-LeakyReLU.
    ref_m = reference_forward_matched(x, layers, w_out, b_out)
    np.testing.assert_allclose(np.asarray(out), np.asarray(ref_m),
                               rtol=1e-3, atol=1e-4)

    # Faithful check vs. exact f32 PyTorch semantics; the looser tolerance
    # only accounts for the bf16 cast feeding the wide-layer MXU dots.
    ref_f = reference_forward(x, layers, w_out, b_out)
    np.testing.assert_allclose(np.asarray(out), np.asarray(ref_f),
                               rtol=3e-2, atol=3e-2)

    # Amortized path: G independent instances in ONE pallas_call with a
    # parallel grid; weight slabs stay VMEM-resident across grid steps and
    # both v7x TensorCores are used.  BN stats remain per-instance.
    G = 4
    key, kxg = jax.random.split(key)
    xg = jax.random.normal(kxg, (G, N, INPUT_SIZE), dtype=jnp.float32)
    outg = jax.block_until_ready(
        relation_head_cone_forward(xg, w_wide, w_tail, v_slab))
    assert outg.shape == (G, N, 1)
    refg = jax.vmap(
        lambda xi: reference_forward_matched(xi, layers, w_out, b_out))(xg)
    np.testing.assert_allclose(np.asarray(outg), np.asarray(refg),
                               rtol=1e-3, atol=1e-4)

    print("KERNEL_OK")
</pallas_src>

<mosaic_0001>
module attributes {stable_mosaic.version = 11 : i64} {
  func.func @_mlp_kernel(%arg0: i32, %arg1: memref<1x16x128xf32, #tpu.memory_space<vmem>>, %arg2: memref<224x128xbf16, #tpu.memory_space<vmem>>, %arg3: memref<40x128xf32, #tpu.memory_space<vmem>>, %arg4: memref<16x128xf32, #tpu.memory_space<vmem>>, %arg5: memref<1x16x1xf32, #tpu.memory_space<vmem>>) attributes {dimension_semantics = [#tpu.dimension_semantics<parallel>], iteration_bounds = array<i64: 1>, scalar_prefetch = 0 : i64, scratch_operands = 0 : i64, tpu.core_type = #tpu.core_type<tc>, window_params = [{transform_indices = @transform_0, window_bounds = array<i64: 1, 16, 128>}, {pipeline_mode = #tpu.pipeline_mode<synchronous>, transform_indices = @transform_1, window_bounds = array<i64: 224, 128>}, {pipeline_mode = #tpu.pipeline_mode<synchronous>, transform_indices = @transform_2, window_bounds = array<i64: 40, 128>}, {pipeline_mode = #tpu.pipeline_mode<synchronous>, transform_indices = @transform_3, window_bounds = array<i64: 16, 128>}, {transform_indices = @transform_4, window_bounds = array<i64: 1, 16, 1>}]} {
    %c0 = arith.constant 0 : index
    %c0_0 = arith.constant 0 : index
    %c0_1 = arith.constant 0 : index
    %0 = vector.load %arg1[%c0, %c0_0, %c0_1] : memref<1x16x128xf32, #tpu.memory_space<vmem>>, vector<1x16x128xf32>
    %1 = vector.shape_cast %0 : vector<1x16x128xf32> to vector<16x128xf32>
    %c0_2 = arith.constant 0 : index
    %c0_3 = arith.constant 0 : index
    %2 = vector.load %arg2[%c0_2, %c0_3] : memref<224x128xbf16, #tpu.memory_space<vmem>>, vector<128x64xbf16>
    %3 = arith.truncf %1 : vector<16x128xf32> to vector<16x128xbf16>
    %cst = arith.constant dense<0.000000e+00> : vector<16x64xf32>
    %4 = tpu.matmul %3, %2, %cst {dimension_numbers = #tpu.dot_dimension_numbers<[1], [0], [0], [1], [0, 0, 1, 1], [], []>} : vector<16x128xbf16>, vector<128x64xbf16>, vector<16x64xf32> -> vector<16x64xf32>
    %cst_4 = arith.constant dense<0.000000e+00> : vector<64xf32>
    %5 = vector.multi_reduction <add>, %4, %cst_4 [0] : vector<16x64xf32> to vector<64xf32>
    %6 = vector.shape_cast %5 : vector<64xf32> to vector<1x64xf32>
    %cst_5 = arith.constant 1.600000e+01 : f32
    %7 = vector.broadcast %cst_5 : f32 to vector<1x64xf32>
    %8 = arith.divf %6, %7 : vector<1x64xf32>
    %9 = arith.mulf %4, %4 : vector<16x64xf32>
    %cst_6 = arith.constant dense<0.000000e+00> : vector<64xf32>
    %10 = vector.multi_reduction <add>, %9, %cst_6 [0] : vector<16x64xf32> to vector<64xf32>
    %11 = vector.shape_cast %10 : vector<64xf32> to vector<1x64xf32>
    %cst_7 = arith.constant 1.600000e+01 : f32
    %12 = vector.broadcast %cst_7 : f32 to vector<1x64xf32>
    %13 = arith.divf %11, %12 : vector<1x64xf32>
    %14 = arith.mulf %8, %8 : vector<1x64xf32>
    %15 = arith.subf %13, %14 : vector<1x64xf32>
    %cst_8 = arith.constant 0.000000e+00 : f32
    %16 = vector.broadcast %cst_8 : f32 to vector<1x64xf32>
    %17 = arith.maximumf %15, %16 : vector<1x64xf32>
    %c0_9 = arith.constant 0 : index
    %c0_10 = arith.constant 0 : index
    %18 = vector.load %arg4[%c0_9, %c0_10] : memref<16x128xf32, #tpu.memory_space<vmem>>, vector<1x64xf32>
    %c1 = arith.constant 1 : index
    %c0_11 = arith.constant 0 : index
    %19 = vector.load %arg4[%c1, %c0_11] : memref<16x128xf32, #tpu.memory_space<vmem>>, vector<1x64xf32>
    %cst_12 = arith.constant 9.99999974E-6 : f32
    %20 = vector.broadcast %cst_12 : f32 to vector<1x64xf32>
    %21 = arith.addf %17, %20 : vector<1x64xf32>
    %22 = math.rsqrt %21 : vector<1x64xf32>
    %23 = arith.mulf %18, %22 : vector<1x64xf32>
    %24 = arith.mulf %8, %23 : vector<1x64xf32>
    %25 = arith.subf %19, %24 : vector<1x64xf32>
    %26 = vector.broadcast %23 : vector<1x64xf32> to vector<16x64xf32>
    %27 = arith.mulf %4, %26 : vector<16x64xf32>
    %28 = vector.broadcast %25 : vector<1x64xf32> to vector<16x64xf32>
    %29 = arith.addf %27, %28 : vector<16x64xf32>
    %cst_13 = arith.constant 0.00999999977 : f32
    %30 = vector.broadcast %cst_13 : f32 to vector<16x64xf32>
    %31 = arith.mulf %30, %29 : vector<16x64xf32>
    %32 = arith.maximumf %29, %31 : vector<16x64xf32>
    %c128 = arith.constant 128 : index
    %c0_14 = arith.constant 0 : index
    %33 = vector.load %arg2[%c128, %c0_14] : memref<224x128xbf16, #tpu.memory_space<vmem>>, vector<64x32xbf16>
    %34 = arith.truncf %32 : vector<16x64xf32> to vector<16x64xbf16>
    %cst_15 = arith.constant dense<0.000000e+00> : vector<16x32xf32>
    %35 = tpu.matmul %34, %33, %cst_15 {dimension_numbers = #tpu.dot_dimension_numbers<[1], [0], [0], [1], [0, 0, 1, 1], [], []>} : vector<16x64xbf16>, vector<64x32xbf16>, vector<16x32xf32> -> vector<16x32xf32>
    %cst_16 = arith.constant dense<0.000000e+00> : vector<32xf32>
    %36 = vector.multi_reduction <add>, %35, %cst_16 [0] : vector<16x32xf32> to vector<32xf32>
    %37 = vector.shape_cast %36 : vector<32xf32> to vector<1x32xf32>
    %cst_17 = arith.constant 1.600000e+01 : f32
    %38 = vector.broadcast %cst_17 : f32 to vector<1x32xf32>
    %39 = arith.divf %37, %38 : vector<1x32xf32>
    %40 = arith.mulf %35, %35 : vector<16x32xf32>
    %cst_18 = arith.constant dense<0.000000e+00> : vector<32xf32>
    %41 = vector.multi_reduction <add>, %40, %cst_18 [0] : vector<16x32xf32> to vector<32xf32>
    %42 = vector.shape_cast %41 : vector<32xf32> to vector<1x32xf32>
    %cst_19 = arith.constant 1.600000e+01 : f32
    %43 = vector.broadcast %cst_19 : f32 to vector<1x32xf32>
    %44 = arith.divf %42, %43 : vector<1x32xf32>
    %45 = arith.mulf %39, %39 : vector<1x32xf32>
    %46 = arith.subf %44, %45 : vector<1x32xf32>
    %cst_20 = arith.constant 0.000000e+00 : f32
    %47 = vector.broadcast %cst_20 : f32 to vector<1x32xf32>
    %48 = arith.maximumf %46, %47 : vector<1x32xf32>
    %c2 = arith.constant 2 : index
    %c0_21 = arith.constant 0 : index
    %49 = vector.load %arg4[%c2, %c0_21] : memref<16x128xf32, #tpu.memory_space<vmem>>, vector<1x32xf32>
    %c3 = arith.constant 3 : index
    %c0_22 = arith.constant 0 : index
    %50 = vector.load %arg4[%c3, %c0_22] : memref<16x128xf32, #tpu.memory_space<vmem>>, vector<1x32xf32>
    %cst_23 = arith.constant 9.99999974E-6 : f32
    %51 = vector.broadcast %cst_23 : f32 to vector<1x32xf32>
    %52 = arith.addf %48, %51 : vector<1x32xf32>
    %53 = math.rsqrt %52 : vector<1x32xf32>
    %54 = arith.mulf %49, %53 : vector<1x32xf32>
    %55 = arith.mulf %39, %54 : vector<1x32xf32>
    %56 = arith.subf %50, %55 : vector<1x32xf32>
    %57 = vector.broadcast %54 : vector<1x32xf32> to vector<16x32xf32>
    %58 = arith.mulf %35, %57 : vector<16x32xf32>
    %59 = vector.broadcast %56 : vector<1x32xf32> to vector<16x32xf32>
    %60 = arith.addf %58, %59 : vector<16x32xf32>
    %cst_24 = arith.constant 0.00999999977 : f32
    %61 = vector.broadcast %cst_24 : f32 to vector<16x32xf32>
    %62 = arith.mulf %61, %60 : vector<16x32xf32>
    %63 = arith.maximumf %60, %62 : vector<16x32xf32>
    %c192 = arith.constant 192 : index
    %c0_25 = arith.constant 0 : index
    %64 = vector.load %arg2[%c192, %c0_25] : memref<224x128xbf16, #tpu.memory_space<vmem>>, vector<32x16xbf16>
    %65 = arith.truncf %63 : vector<16x32xf32> to vector<16x32xbf16>
    %cst_26 = arith.constant dense<0.000000e+00> : vector<16x16xf32>
    %66 = tpu.matmul %65, %64, %cst_26 {dimension_numbers = #tpu.dot_dimension_numbers<[1], [0], [0], [1], [0, 0, 1, 1], [], []>} : vector<16x32xbf16>, vector<32x16xbf16>, vector<16x16xf32> -> vector<16x16xf32>
    %cst_27 = arith.constant dense<0.000000e+00> : vector<16xf32>
    %67 = vector.multi_reduction <add>, %66, %cst_27 [0] : vector<16x16xf32> to vector<16xf32>
    %68 = vector.shape_cast %67 : vector<16xf32> to vector<1x16xf32>
    %cst_28 = arith.constant 1.600000e+01 : f32
    %69 = vector.broadcast %cst_28 : f32 to vector<1x16xf32>
    %70 = arith.divf %68, %69 : vector<1x16xf32>
    %71 = arith.mulf %66, %66 : vector<16x16xf32>
    %cst_29 = arith.constant dense<0.000000e+00> : vector<16xf32>
    %72 = vector.multi_reduction <add>, %71, %cst_29 [0] : vector<16x16xf32> to vector<16xf32>
    %73 = vector.shape_cast %72 : vector<16xf32> to vector<1x16xf32>
    %cst_30 = arith.constant 1.600000e+01 : f32
    %74 = vector.broadcast %cst_30 : f32 to vector<1x16xf32>
    %75 = arith.divf %73, %74 : vector<1x16xf32>
    %76 = arith.mulf %70, %70 : vector<1x16xf32>
    %77 = arith.subf %75, %76 : vector<1x16xf32>
    %cst_31 = arith.constant 0.000000e+00 : f32
    %78 = vector.broadcast %cst_31 : f32 to vector<1x16xf32>
    %79 = arith.maximumf %77, %78 : vector<1x16xf32>
    %c4 = arith.constant 4 : index
    %c0_32 = arith.constant 0 : index
    %80 = vector.load %arg4[%c4, %c0_32] : memref<16x128xf32, #tpu.memory_space<vmem>>, vector<1x16xf32>
    %c5 = arith.constant 5 : index
    %c0_33 = arith.constant 0 : index
    %81 = vector.load %arg4[%c5, %c0_33] : memref<16x128xf32, #tpu.memory_space<vmem>>, vector<1x16xf32>
    %cst_34 = arith.constant 9.99999974E-6 : f32
    %82 = vector.broadcast %cst_34 : f32 to vector<1x16xf32>
    %83 = arith.addf %79, %82 : vector<1x16xf32>
    %84 = math.rsqrt %83 : vector<1x16xf32>
    %85 = arith.mulf %80, %84 : vector<1x16xf32>
    %86 = arith.mulf %70, %85 : vector<1x16xf32>
    %87 = arith.subf %81, %86 : vector<1x16xf32>
    %88 = vector.broadcast %85 : vector<1x16xf32> to vector<16x16xf32>
    %89 = arith.mulf %66, %88 : vector<16x16xf32>
    %90 = vector.broadcast %87 : vector<1x16xf32> to vector<16x16xf32>
    %91 = arith.addf %89, %90 : vector<16x16xf32>
    %cst_35 = arith.constant 0.00999999977 : f32
    %92 = vector.broadcast %cst_35 : f32 to vector<16x16xf32>
    %93 = arith.mulf %92, %91 : vector<16x16xf32>
    %94 = arith.maximumf %91, %93 : vector<16x16xf32>
    %c0_36 = arith.constant 0 : index
    %c0_37 = arith.constant 0 : index
    %95 = vector.load %arg3[%c0_36, %c0_37] : memref<40x128xf32, #tpu.memory_space<vmem>>, vector<16x8xf32>
    %96 = vector.extract_strided_slice %94 {offsets = [0, 0], sizes = [16, 1], strides = [1, 1]} : vector<16x16xf32> to vector<16x1xf32>
    %97 = vector.extract_strided_slice %95 {offsets = [0, 0], sizes = [1, 8], strides = [1, 1]} : vector<16x8xf32> to vector<1x8xf32>
    %98 = vector.broadcast %96 : vector<16x1xf32> to vector<16x8xf32>
    %99 = vector.broadcast %97 : vector<1x8xf32> to vector<16x8xf32>
    %100 = arith.mulf %98, %99 : vector<16x8xf32>
    %101 = vector.extract_strided_slice %94 {offsets = [0, 1], sizes = [16, 1], strides = [1, 1]} : vector<16x16xf32> to vector<16x1xf32>
    %102 = vector.extract_strided_slice %95 {offsets = [1, 0], sizes = [1, 8], strides = [1, 1]} : vector<16x8xf32> to vector<1x8xf32>
    %103 = vector.broadcast %101 : vector<16x1xf32> to vector<16x8xf32>
    %104 = vector.broadcast %102 : vector<1x8xf32> to vector<16x8xf32>
    %105 = arith.mulf %103, %104 : vector<16x8xf32>
    %106 = arith.addf %100, %105 : vector<16x8xf32>
    %107 = vector.extract_strided_slice %94 {offsets = [0, 2], sizes = [16, 1], strides = [1, 1]} : vector<16x16xf32> to vector<16x1xf32>
    %108 = vector.extract_strided_slice %95 {offsets = [2, 0], sizes = [1, 8], strides = [1, 1]} : vector<16x8xf32> to vector<1x8xf32>
    %109 = vector.broadcast %107 : vector<16x1xf32> to vector<16x8xf32>
    %110 = vector.broadcast %108 : vector<1x8xf32> to vector<16x8xf32>
    %111 = arith.mulf %109, %110 : vector<16x8xf32>
    %112 = arith.addf %106, %111 : vector<16x8xf32>
    %113 = vector.extract_strided_slice %94 {offsets = [0, 3], sizes = [16, 1], strides = [1, 1]} : vector<16x16xf32> to vector<16x1xf32>
    %114 = vector.extract_strided_slice %95 {offsets = [3, 0], sizes = [1, 8], strides = [1, 1]} : vector<16x8xf32> to vector<1x8xf32>
    %115 = vector.broadcast %113 : vector<16x1xf32> to vector<16x8xf32>
    %116 = vector.broadcast %114 : vector<1x8xf32> to vector<16x8xf32>
    %117 = arith.mulf %115, %116 : vector<16x8xf32>
    %118 = arith.addf %112, %117 : vector<16x8xf32>
    %119 = vector.extract_strided_slice %94 {offsets = [0, 4], sizes = [16, 1], strides = [1, 1]} : vector<16x16xf32> to vector<16x1xf32>
    %120 = vector.extract_strided_slice %95 {offsets = [4, 0], sizes = [1, 8], strides = [1, 1]} : vector<16x8xf32> to vector<1x8xf32>
    %121 = vector.broadcast %119 : vector<16x1xf32> to vector<16x8xf32>
    %122 = vector.broadcast %120 : vector<1x8xf32> to vector<16x8xf32>
    %123 = arith.mulf %121, %122 : vector<16x8xf32>
    %124 = arith.addf %118, %123 : vector<16x8xf32>
    %125 = vector.extract_strided_slice %94 {offsets = [0, 5], sizes = [16, 1], strides = [1, 1]} : vector<16x16xf32> to vector<16x1xf32>
    %126 = vector.extract_strided_slice %95 {offsets = [5, 0], sizes = [1, 8], strides = [1, 1]} : vector<16x8xf32> to vector<1x8xf32>
    %127 = vector.broadcast %125 : vector<16x1xf32> to vector<16x8xf32>
    %128 = vector.broadcast %126 : vector<1x8xf32> to vector<16x8xf32>
    %129 = arith.mulf %127, %128 : vector<16x8xf32>
    %130 = arith.addf %124, %129 : vector<16x8xf32>
    %131 = vector.extract_strided_slice %94 {offsets = [0, 6], sizes = [16, 1], strides = [1, 1]} : vector<16x16xf32> to vector<16x1xf32>
    %132 = vector.extract_strided_slice %95 {offsets = [6, 0], sizes = [1, 8], strides = [1, 1]} : vector<16x8xf32> to vector<1x8xf32>
    %133 = vector.broadcast %131 : vector<16x1xf32> to vector<16x8xf32>
    %134 = vector.broadcast %132 : vector<1x8xf32> to vector<16x8xf32>
    %135 = arith.mulf %133, %134 : vector<16x8xf32>
    %136 = arith.addf %130, %135 : vector<16x8xf32>
    %137 = vector.extract_strided_slice %94 {offsets = [0, 7], sizes = [16, 1], strides = [1, 1]} : vector<16x16xf32> to vector<16x1xf32>
    %138 = vector.extract_strided_slice %95 {offsets = [7, 0], sizes = [1, 8], strides = [1, 1]} : vector<16x8xf32> to vector<1x8xf32>
    %139 = vector.broadcast %137 : vector<16x1xf32> to vector<16x8xf32>
    %140 = vector.broadcast %138 : vector<1x8xf32> to vector<16x8xf32>
    %141 = arith.mulf %139, %140 : vector<16x8xf32>
    %142 = arith.addf %136, %141 : vector<16x8xf32>
    %143 = vector.extract_strided_slice %94 {offsets = [0, 8], sizes = [16, 1], strides = [1, 1]} : vector<16x16xf32> to vector<16x1xf32>
    %144 = vector.extract_strided_slice %95 {offsets = [8, 0], sizes = [1, 8], strides = [1, 1]} : vector<16x8xf32> to vector<1x8xf32>
    %145 = vector.broadcast %143 : vector<16x1xf32> to vector<16x8xf32>
    %146 = vector.broadcast %144 : vector<1x8xf32> to vector<16x8xf32>
    %147 = arith.mulf %145, %146 : vector<16x8xf32>
    %148 = arith.addf %142, %147 : vector<16x8xf32>
    %149 = vector.extract_strided_slice %94 {offsets = [0, 9], sizes = [16, 1], strides = [1, 1]} : vector<16x16xf32> to vector<16x1xf32>
    %150 = vector.extract_strided_slice %95 {offsets = [9, 0], sizes = [1, 8], strides = [1, 1]} : vector<16x8xf32> to vector<1x8xf32>
    %151 = vector.broadcast %149 : vector<16x1xf32> to vector<16x8xf32>
    %152 = vector.broadcast %150 : vector<1x8xf32> to vector<16x8xf32>
    %153 = arith.mulf %151, %152 : vector<16x8xf32>
    %154 = arith.addf %148, %153 : vector<16x8xf32>
    %155 = vector.extract_strided_slice %94 {offsets = [0, 10], sizes = [16, 1], strides = [1, 1]} : vector<16x16xf32> to vector<16x1xf32>
    %156 = vector.extract_strided_slice %95 {offsets = [10, 0], sizes = [1, 8], strides = [1, 1]} : vector<16x8xf32> to vector<1x8xf32>
    %157 = vector.broadcast %155 : vector<16x1xf32> to vector<16x8xf32>
    %158 = vector.broadcast %156 : vector<1x8xf32> to vector<16x8xf32>
    %159 = arith.mulf %157, %158 : vector<16x8xf32>
    %160 = arith.addf %154, %159 : vector<16x8xf32>
    %161 = vector.extract_strided_slice %94 {offsets = [0, 11], sizes = [16, 1], strides = [1, 1]} : vector<16x16xf32> to vector<16x1xf32>
    %162 = vector.extract_strided_slice %95 {offsets = [11, 0], sizes = [1, 8], strides = [1, 1]} : vector<16x8xf32> to vector<1x8xf32>
    %163 = vector.broadcast %161 : vector<16x1xf32> to vector<16x8xf32>
    %164 = vector.broadcast %162 : vector<1x8xf32> to vector<16x8xf32>
    %165 = arith.mulf %163, %164 : vector<16x8xf32>
    %166 = arith.addf %160, %165 : vector<16x8xf32>
    %167 = vector.extract_strided_slice %94 {offsets = [0, 12], sizes = [16, 1], strides = [1, 1]} : vector<16x16xf32> to vector<16x1xf32>
    %168 = vector.extract_strided_slice %95 {offsets = [12, 0], sizes = [1, 8], strides = [1, 1]} : vector<16x8xf32> to vector<1x8xf32>
    %169 = vector.broadcast %167 : vector<16x1xf32> to vector<16x8xf32>
    %170 = vector.broadcast %168 : vector<1x8xf32> to vector<16x8xf32>
    %171 = arith.mulf %169, %170 : vector<16x8xf32>
    %172 = arith.addf %166, %171 : vector<16x8xf32>
    %173 = vector.extract_strided_slice %94 {offsets = [0, 13], sizes = [16, 1], strides = [1, 1]} : vector<16x16xf32> to vector<16x1xf32>
    %174 = vector.extract_strided_slice %95 {offsets = [13, 0], sizes = [1, 8], strides = [1, 1]} : vector<16x8xf32> to vector<1x8xf32>
    %175 = vector.broadcast %173 : vector<16x1xf32> to vector<16x8xf32>
    %176 = vector.broadcast %174 : vector<1x8xf32> to vector<16x8xf32>
    %177 = arith.mulf %175, %176 : vector<16x8xf32>
    %178 = arith.addf %172, %177 : vector<16x8xf32>
    %179 = vector.extract_strided_slice %94 {offsets = [0, 14], sizes = [16, 1], strides = [1, 1]} : vector<16x16xf32> to vector<16x1xf32>
    %180 = vector.extract_strided_slice %95 {offsets = [14, 0], sizes = [1, 8], strides = [1, 1]} : vector<16x8xf32> to vector<1x8xf32>
    %181 = vector.broadcast %179 : vector<16x1xf32> to vector<16x8xf32>
    %182 = vector.broadcast %180 : vector<1x8xf32> to vector<16x8xf32>
    %183 = arith.mulf %181, %182 : vector<16x8xf32>
    %184 = arith.addf %178, %183 : vector<16x8xf32>
    %185 = vector.extract_strided_slice %94 {offsets = [0, 15], sizes = [16, 1], strides = [1, 1]} : vector<16x16xf32> to vector<16x1xf32>
    %186 = vector.extract_strided_slice %95 {offsets = [15, 0], sizes = [1, 8], strides = [1, 1]} : vector<16x8xf32> to vector<1x8xf32>
    %187 = vector.broadcast %185 : vector<16x1xf32> to vector<16x8xf32>
    %188 = vector.broadcast %186 : vector<1x8xf32> to vector<16x8xf32>
    %189 = arith.mulf %187, %188 : vector<16x8xf32>
    %190 = arith.addf %184, %189 : vector<16x8xf32>
    %cst_38 = arith.constant dense<0.000000e+00> : vector<8xf32>
    %191 = vector.multi_reduction <add>, %190, %cst_38 [0] : vector<16x8xf32> to vector<8xf32>
    %192 = vector.shape_cast %191 : vector<8xf32> to vector<1x8xf32>
    %cst_39 = arith.constant 1.600000e+01 : f32
    %193 = vector.broadcast %cst_39 : f32 to vector<1x8xf32>
    %194 = arith.divf %192, %193 : vector<1x8xf32>
    %195 = arith.mulf %190, %190 : vector<16x8xf32>
    %cst_40 = arith.constant dense<0.000000e+00> : vector<8xf32>
    %196 = vector.multi_reduction <add>, %195, %cst_40 [0] : vector<16x8xf32> to vector<8xf32>
    %197 = vector.shape_cast %196 : vector<8xf32> to vector<1x8xf32>
    %cst_41 = arith.constant 1.600000e+01 : f32
    %198 = vector.broadcast %cst_41 : f32 to vector<1x8xf32>
    %199 = arith.divf %197, %198 : vector<1x8xf32>
    %200 = arith.mulf %194, %194 : vector<1x8xf32>
    %201 = arith.subf %199, %200 : vector<1x8xf32>
    %cst_42 = arith.constant 0.000000e+00 : f32
    %202 = vector.broadcast %cst_42 : f32 to vector<1x8xf32>
    %203 = arith.maximumf %201, %202 : vector<1x8xf32>
    %c6 = arith.constant 6 : index
    %c0_43 = arith.constant 0 : index
    %204 = vector.load %arg4[%c6, %c0_43] : memref<16x128xf32, #tpu.memory_space<vmem>>, vector<1x8xf32>
    %c7 = arith.constant 7 : index
    %c0_44 = arith.constant 0 : index
    %205 = vector.load %arg4[%c7, %c0_44] : memref<16x128xf32, #tpu.memory_space<vmem>>, vector<1x8xf32>
    %cst_45 = arith.constant 9.99999974E-6 : f32
    %206 = vector.broadcast %cst_45 : f32 to vector<1x8xf32>
    %207 = arith.addf %203, %206 : vector<1x8xf32>
    %208 = math.rsqrt %207 : vector<1x8xf32>
    %209 = arith.mulf %204, %208 : vector<1x8xf32>
    %210 = arith.mulf %194, %209 : vector<1x8xf32>
    %211 = arith.subf %205, %210 : vector<1x8xf32>
    %212 = vector.broadcast %209 : vector<1x8xf32> to vector<16x8xf32>
    %213 = arith.mulf %190, %212 : vector<16x8xf32>
    %214 = vector.broadcast %211 : vector<1x8xf32> to vector<16x8xf32>
    %215 = arith.addf %213, %214 : vector<16x8xf32>
    %cst_46 = arith.constant 0.00999999977 : f32
    %216 = vector.broadcast %cst_46 : f32 to vector<16x8xf32>
    %217 = arith.mulf %216, %215 : vector<16x8xf32>
    %218 = arith.maximumf %215, %217 : vector<16x8xf32>
    %c16 = arith.constant 16 : index
    %c0_47 = arith.constant 0 : index
    %219 = vector.load %arg3[%c16, %c0_47] : memref<40x128xf32, #tpu.memory_space<vmem>>, vector<8x4xf32>
    %220 = vector.extract_strided_slice %218 {offsets = [0, 0], sizes = [16, 1], strides = [1, 1]} : vector<16x8xf32> to vector<16x1xf32>
    %221 = vector.extract_strided_slice %219 {offsets = [0, 0], sizes = [1, 4], strides = [1, 1]} : vector<8x4xf32> to vector<1x4xf32>
    %222 = vector.broadcast %220 : vector<16x1xf32> to vector<16x4xf32>
    %223 = vector.broadcast %221 : vector<1x4xf32> to vector<16x4xf32>
    %224 = arith.mulf %222, %223 : vector<16x4xf32>
    %225 = vector.extract_strided_slice %218 {offsets = [0, 1], sizes = [16, 1], strides = [1, 1]} : vector<16x8xf32> to vector<16x1xf32>
    %226 = vector.extract_strided_slice %219 {offsets = [1, 0], sizes = [1, 4], strides = [1, 1]} : vector<8x4xf32> to vector<1x4xf32>
    %227 = vector.broadcast %225 : vector<16x1xf32> to vector<16x4xf32>
    %228 = vector.broadcast %226 : vector<1x4xf32> to vector<16x4xf32>
    %229 = arith.mulf %227, %228 : vector<16x4xf32>
    %230 = arith.addf %224, %229 : vector<16x4xf32>
    %231 = vector.extract_strided_slice %218 {offsets = [0, 2], sizes = [16, 1], strides = [1, 1]} : vector<16x8xf32> to vector<16x1xf32>
    %232 = vector.extract_strided_slice %219 {offsets = [2, 0], sizes = [1, 4], strides = [1, 1]} : vector<8x4xf32> to vector<1x4xf32>
    %233 = vector.broadcast %231 : vector<16x1xf32> to vector<16x4xf32>
    %234 = vector.broadcast %232 : vector<1x4xf32> to vector<16x4xf32>
    %235 = arith.mulf %233, %234 : vector<16x4xf32>
    %236 = arith.addf %230, %235 : vector<16x4xf32>
    %237 = vector.extract_strided_slice %218 {offsets = [0, 3], sizes = [16, 1], strides = [1, 1]} : vector<16x8xf32> to vector<16x1xf32>
    %238 = vector.extract_strided_slice %219 {offsets = [3, 0], sizes = [1, 4], strides = [1, 1]} : vector<8x4xf32> to vector<1x4xf32>
    %239 = vector.broadcast %237 : vector<16x1xf32> to vector<16x4xf32>
    %240 = vector.broadcast %238 : vector<1x4xf32> to vector<16x4xf32>
    %241 = arith.mulf %239, %240 : vector<16x4xf32>
    %242 = arith.addf %236, %241 : vector<16x4xf32>
    %243 = vector.extract_strided_slice %218 {offsets = [0, 4], sizes = [16, 1], strides = [1, 1]} : vector<16x8xf32> to vector<16x1xf32>
    %244 = vector.extract_strided_slice %219 {offsets = [4, 0], sizes = [1, 4], strides = [1, 1]} : vector<8x4xf32> to vector<1x4xf32>
    %245 = vector.broadcast %243 : vector<16x1xf32> to vector<16x4xf32>
    %246 = vector.broadcast %244 : vector<1x4xf32> to vector<16x4xf32>
    %247 = arith.mulf %245, %246 : vector<16x4xf32>
    %248 = arith.addf %242, %247 : vector<16x4xf32>
    %249 = vector.extract_strided_slice %218 {offsets = [0, 5], sizes = [16, 1], strides = [1, 1]} : vector<16x8xf32> to vector<16x1xf32>
    %250 = vector.extract_strided_slice %219 {offsets = [5, 0], sizes = [1, 4], strides = [1, 1]} : vector<8x4xf32> to vector<1x4xf32>
    %251 = vector.broadcast %249 : vector<16x1xf32> to vector<16x4xf32>
    %252 = vector.broadcast %250 : vector<1x4xf32> to vector<16x4xf32>
    %253 = arith.mulf %251, %252 : vector<16x4xf32>
    %254 = arith.addf %248, %253 : vector<16x4xf32>
    %255 = vector.extract_strided_slice %218 {offsets = [0, 6], sizes = [16, 1], strides = [1, 1]} : vector<16x8xf32> to vector<16x1xf32>
    %256 = vector.extract_strided_slice %219 {offsets = [6, 0], sizes = [1, 4], strides = [1, 1]} : vector<8x4xf32> to vector<1x4xf32>
    %257 = vector.broadcast %255 : vector<16x1xf32> to vector<16x4xf32>
    %258 = vector.broadcast %256 : vector<1x4xf32> to vector<16x4xf32>
    %259 = arith.mulf %257, %258 : vector<16x4xf32>
    %260 = arith.addf %254, %259 : vector<16x4xf32>
    %261 = vector.extract_strided_slice %218 {offsets = [0, 7], sizes = [16, 1], strides = [1, 1]} : vector<16x8xf32> to vector<16x1xf32>
    %262 = vector.extract_strided_slice %219 {offsets = [7, 0], sizes = [1, 4], strides = [1, 1]} : vector<8x4xf32> to vector<1x4xf32>
    %263 = vector.broadcast %261 : vector<16x1xf32> to vector<16x4xf32>
    %264 = vector.broadcast %262 : vector<1x4xf32> to vector<16x4xf32>
    %265 = arith.mulf %263, %264 : vector<16x4xf32>
    %266 = arith.addf %260, %265 : vector<16x4xf32>
    %cst_48 = arith.constant dense<0.000000e+00> : vector<4xf32>
    %267 = vector.multi_reduction <add>, %266, %cst_48 [0] : vector<16x4xf32> to vector<4xf32>
    %268 = vector.shape_cast %267 : vector<4xf32> to vector<1x4xf32>
    %cst_49 = arith.constant 1.600000e+01 : f32
    %269 = vector.broadcast %cst_49 : f32 to vector<1x4xf32>
    %270 = arith.divf %268, %269 : vector<1x4xf32>
    %271 = arith.mulf %266, %266 : vector<16x4xf32>
    %cst_50 = arith.constant dense<0.000000e+00> : vector<4xf32>
    %272 = vector.multi_reduction <add>, %271, %cst_50 [0] : vector<16x4xf32> to vector<4xf32>
    %273 = vector.shape_cast %272 : vector<4xf32> to vector<1x4xf32>
    %cst_51 = arith.constant 1.600000e+01 : f32
    %274 = vector.broadcast %cst_51 : f32 to vector<1x4xf32>
    %275 = arith.divf %273, %274 : vector<1x4xf32>
    %276 = arith.mulf %270, %270 : vector<1x4xf32>
    %277 = arith.subf %275, %276 : vector<1x4xf32>
    %cst_52 = arith.constant 0.000000e+00 : f32
    %278 = vector.broadcast %cst_52 : f32 to vector<1x4xf32>
    %279 = arith.maximumf %277, %278 : vector<1x4xf32>
    %c8 = arith.constant 8 : index
    %c0_53 = arith.constant 0 : index
    %280 = vector.load %arg4[%c8, %c0_53] : memref<16x128xf32, #tpu.memory_space<vmem>>, vector<1x4xf32>
    %c9 = arith.constant 9 : index
    %c0_54 = arith.constant 0 : index
    %281 = vector.load %arg4[%c9, %c0_54] : memref<16x128xf32, #tpu.memory_space<vmem>>, vector<1x4xf32>
    %cst_55 = arith.constant 9.99999974E-6 : f32
    %282 = vector.broadcast %cst_55 : f32 to vector<1x4xf32>
    %283 = arith.addf %279, %282 : vector<1x4xf32>
    %284 = math.rsqrt %283 : vector<1x4xf32>
    %285 = arith.mulf %280, %284 : vector<1x4xf32>
    %286 = arith.mulf %270, %285 : vector<1x4xf32>
    %287 = arith.subf %281, %286 : vector<1x4xf32>
    %288 = vector.broadcast %285 : vector<1x4xf32> to vector<16x4xf32>
    %289 = arith.mulf %266, %288 : vector<16x4xf32>
    %290 = vector.broadcast %287 : vector<1x4xf32> to vector<16x4xf32>
    %291 = arith.addf %289, %290 : vector<16x4xf32>
    %cst_56 = arith.constant 0.00999999977 : f32
    %292 = vector.broadcast %cst_56 : f32 to vector<16x4xf32>
    %293 = arith.mulf %292, %291 : vector<16x4xf32>
    %294 = arith.maximumf %291, %293 : vector<16x4xf32>
    %c24 = arith.constant 24 : index
    %c0_57 = arith.constant 0 : index
    %295 = vector.load %arg3[%c24, %c0_57] : memref<40x128xf32, #tpu.memory_space<vmem>>, vector<4x2xf32>
    %296 = vector.extract_strided_slice %294 {offsets = [0, 0], sizes = [16, 1], strides = [1, 1]} : vector<16x4xf32> to vector<16x1xf32>
    %297 = vector.extract_strided_slice %295 {offsets = [0, 0], sizes = [1, 2], strides = [1, 1]} : vector<4x2xf32> to vector<1x2xf32>
    %298 = vector.broadcast %296 : vector<16x1xf32> to vector<16x2xf32>
    %299 = vector.broadcast %297 : vector<1x2xf32> to vector<16x2xf32>
    %300 = arith.mulf %298, %299 : vector<16x2xf32>
    %301 = vector.extract_strided_slice %294 {offsets = [0, 1], sizes = [16, 1], strides = [1, 1]} : vector<16x4xf32> to vector<16x1xf32>
    %302 = vector.extract_strided_slice %295 {offsets = [1, 0], sizes = [1, 2], strides = [1, 1]} : vector<4x2xf32> to vector<1x2xf32>
    %303 = vector.broadcast %301 : vector<16x1xf32> to vector<16x2xf32>
    %304 = vector.broadcast %302 : vector<1x2xf32> to vector<16x2xf32>
    %305 = arith.mulf %303, %304 : vector<16x2xf32>
    %306 = arith.addf %300, %305 : vector<16x2xf32>
    %307 = vector.extract_strided_slice %294 {offsets = [0, 2], sizes = [16, 1], strides = [1, 1]} : vector<16x4xf32> to vector<16x1xf32>
    %308 = vector.extract_strided_slice %295 {offsets = [2, 0], sizes = [1, 2], strides = [1, 1]} : vector<4x2xf32> to vector<1x2xf32>
    %309 = vector.broadcast %307 : vector<16x1xf32> to vector<16x2xf32>
    %310 = vector.broadcast %308 : vector<1x2xf32> to vector<16x2xf32>
    %311 = arith.mulf %309, %310 : vector<16x2xf32>
    %312 = arith.addf %306, %311 : vector<16x2xf32>
    %313 = vector.extract_strided_slice %294 {offsets = [0, 3], sizes = [16, 1], strides = [1, 1]} : vector<16x4xf32> to vector<16x1xf32>
    %314 = vector.extract_strided_slice %295 {offsets = [3, 0], sizes = [1, 2], strides = [1, 1]} : vector<4x2xf32> to vector<1x2xf32>
    %315 = vector.broadcast %313 : vector<16x1xf32> to vector<16x2xf32>
    %316 = vector.broadcast %314 : vector<1x2xf32> to vector<16x2xf32>
    %317 = arith.mulf %315, %316 : vector<16x2xf32>
    %318 = arith.addf %312, %317 : vector<16x2xf32>
    %cst_58 = arith.constant dense<0.000000e+00> : vector<2xf32>
    %319 = vector.multi_reduction <add>, %318, %cst_58 [0] : vector<16x2xf32> to vector<2xf32>
    %320 = vector.shape_cast %319 : vector<2xf32> to vector<1x2xf32>
    %cst_59 = arith.constant 1.600000e+01 : f32
    %321 = vector.broadcast %cst_59 : f32 to vector<1x2xf32>
    %322 = arith.divf %320, %321 : vector<1x2xf32>
    %323 = arith.mulf %318, %318 : vector<16x2xf32>
    %cst_60 = arith.constant dense<0.000000e+00> : vector<2xf32>
    %324 = vector.multi_reduction <add>, %323, %cst_60 [0] : vector<16x2xf32> to vector<2xf32>
    %325 = vector.shape_cast %324 : vector<2xf32> to vector<1x2xf32>
    %cst_61 = arith.constant 1.600000e+01 : f32
    %326 = vector.broadcast %cst_61 : f32 to vector<1x2xf32>
    %327 = arith.divf %325, %326 : vector<1x2xf32>
    %328 = arith.mulf %322, %322 : vector<1x2xf32>
    %329 = arith.subf %327, %328 : vector<1x2xf32>
    %cst_62 = arith.constant 0.000000e+00 : f32
    %330 = vector.broadcast %cst_62 : f32 to vector<1x2xf32>
    %331 = arith.maximumf %329, %330 : vector<1x2xf32>
    %c10 = arith.constant 10 : index
    %c0_63 = arith.constant 0 : index
    %332 = vector.load %arg4[%c10, %c0_63] : memref<16x128xf32, #tpu.memory_space<vmem>>, vector<1x2xf32>
    %c11 = arith.constant 11 : index
    %c0_64 = arith.constant 0 : index
    %333 = vector.load %arg4[%c11, %c0_64] : memref<16x128xf32, #tpu.memory_space<vmem>>, vector<1x2xf32>
    %cst_65 = arith.constant 9.99999974E-6 : f32
    %334 = vector.broadcast %cst_65 : f32 to vector<1x2xf32>
    %335 = arith.addf %331, %334 : vector<1x2xf32>
    %336 = math.rsqrt %335 : vector<1x2xf32>
    %337 = arith.mulf %332, %336 : vector<1x2xf32>
    %338 = arith.mulf %322, %337 : vector<1x2xf32>
    %339 = arith.subf %333, %338 : vector<1x2xf32>
    %340 = vector.broadcast %337 : vector<1x2xf32> to vector<16x2xf32>
    %341 = arith.mulf %318, %340 : vector<16x2xf32>
    %342 = vector.broadcast %339 : vector<1x2xf32> to vector<16x2xf32>
    %343 = arith.addf %341, %342 : vector<16x2xf32>
    %cst_66 = arith.constant 0.00999999977 : f32
    %344 = vector.broadcast %cst_66 : f32 to vector<16x2xf32>
    %345 = arith.mulf %344, %343 : vector<16x2xf32>
    %346 = arith.maximumf %343, %345 : vector<16x2xf32>
    %c32 = arith.constant 32 : index
    %c0_67 = arith.constant 0 : index
    %347 = vector.load %arg3[%c32, %c0_67] : memref<40x128xf32, #tpu.memory_space<vmem>>, vector<2x1xf32>
    %c12 = arith.constant 12 : index
    %c0_68 = arith.constant 0 : index
    %348 = vector.load %arg4[%c12, %c0_68] : memref<16x128xf32, #tpu.memory_space<vmem>>, vector<1x1xf32>
    %349 = vector.extract_strided_slice %346 {offsets = [0, 0], sizes = [16, 1], strides = [1, 1]} : vector<16x2xf32> to vector<16x1xf32>
    %350 = vector.extract_strided_slice %347 {offsets = [0, 0], sizes = [1, 1], strides = [1, 1]} : vector<2x1xf32> to vector<1x1xf32>
    %351 = vector.broadcast %350 : vector<1x1xf32> to vector<16x1xf32>
    %352 = arith.mulf %349, %351 : vector<16x1xf32>
    %353 = vector.extract_strided_slice %346 {offsets = [0, 1], sizes = [16, 1], strides = [1, 1]} : vector<16x2xf32> to vector<16x1xf32>
    %354 = vector.extract_strided_slice %347 {offsets = [1, 0], sizes = [1, 1], strides = [1, 1]} : vector<2x1xf32> to vector<1x1xf32>
    %355 = vector.broadcast %354 : vector<1x1xf32> to vector<16x1xf32>
    %356 = arith.mulf %353, %355 : vector<16x1xf32>
    %357 = arith.addf %352, %356 : vector<16x1xf32>
    %358 = vector.broadcast %348 : vector<1x1xf32> to vector<16x1xf32>
    %359 = arith.addf %357, %358 : vector<16x1xf32>
    %c0_69 = arith.constant 0 : index
    %c0_70 = arith.constant 0 : index
    %c0_71 = arith.constant 0 : index
    %360 = vector.load %arg5[%c0_69, %c0_70, %c0_71] : memref<1x16x1xf32, #tpu.memory_space<vmem>>, vector<1x16x1xf32>
    %361 = vector.shape_cast %360 : vector<1x16x1xf32> to vector<16x1xf32>
    %362 = vector.shape_cast %359 : vector<16x1xf32> to vector<1x16x1xf32>
    tpu.vector_store %arg5[%c0_69, %c0_70, %c0_71], %362 {strides = array<i32>} : memref<1x16x1xf32, #tpu.memory_space<vmem>>, vector<1x16x1xf32>,
    return
  }
  func.func @transform_0(%arg0: i32) -> (i32, i32, i32) {
    %c0_i32 = arith.constant 0 : i32
    %c0_i32_0 = arith.constant 0 : i32
    %c0_i32_1 = arith.constant 0 : i32
    return %arg0, %c0_i32, %c0_i32_0 : i32, i32, i32
  }
  func.func @transform_1(%arg0: i32) -> (i32, i32) {
    %c0_i32 = arith.constant 0 : i32
    %c0_i32_0 = arith.constant 0 : i32
    %c0_i32_1 = arith.constant 0 : i32
    return %c0_i32, %c0_i32_0 : i32, i32
  }
  func.func @transform_2(%arg0: i32) -> (i32, i32) {
    %c0_i32 = arith.constant 0 : i32
    %c0_i32_0 = arith.constant 0 : i32
    %c0_i32_1 = arith.constant 0 : i32
    return %c0_i32, %c0_i32_0 : i32, i32
  }
  func.func @transform_3(%arg0: i32) -> (i32, i32) {
    %c0_i32 = arith.constant 0 : i32
    %c0_i32_0 = arith.constant 0 : i32
    %c0_i32_1 = arith.constant 0 : i32
    return %c0_i32, %c0_i32_0 : i32, i32
  }
  func.func @transform_4(%arg0: i32) -> (i32, i32, i32) {
    %c0_i32 = arith.constant 0 : i32
    %c0_i32_0 = arith.constant 0 : i32
    %c0_i32_1 = arith.constant 0 : i32
    return %arg0, %c0_i32, %c0_i32_0 : i32, i32, i32
  }
}

</mosaic_0001>

<llo_original>
// kernel: tpu_custom_call.1
$region0: #{tpu_custom_call.1}
  #allocation0 [shape = 'u32[]', space=smem, size = 0x4, offset = 0x4, fixed_abs, tag = 'smem constant byte address 0x4 - core index']
  #allocation1 [shape = 'u32[144,128]{1,0:T(1,128)}', space=vmem, size = 0x12000, scoped, tag = 'internal scratch']
  %s0 = inlined_call_operand.hbm [shape: f32[1,16,128], index: 0, kind: input, shape index: {}]
  %s1 = inlined_call_operand.hbm [shape: bf16[224,128], index: 1, kind: input, shape index: {}]
  %s2 = inlined_call_operand.hbm [shape: f32[40,128], index: 2, kind: input, shape index: {}]
  %s3 = inlined_call_operand.hbm [shape: f32[16,128], index: 3, kind: input, shape index: {}]
  %s4 = inlined_call_operand.vmem [shape: f32[1,16,1], index: 4, kind: output, shape index: {}]
  %s5 = sld [smem:[#allocation0]]
  $region42: #{tpu_custom_call.1} parent=0
    _
  %s7 = ssub.s32 1, %s5
  %s8 = scalar_select 0, %s7, %s5
  $region1: #{tpu_custom_call.1} parent=0
    #allocation2 [shape = 'u8[8192]{0}', space=vmem, size = 0x2000, scoped, tag = 'input window, operand 0, single buffered']
    #allocation3 [shape = 's32[1]{0}', space=sflag, size = 0x4, scoped, tag = 'scoped memory for tpu_custom_call.1']
    #allocation4 [shape = 'u8[57344]{0}', space=vmem, size = 0xe000, scoped, tag = 'input window, operand 1, single buffered']
    #allocation5 [shape = 's32[1]{0}', space=sflag, size = 0x4, scoped, tag = 'scoped memory for tpu_custom_call.1']
    #allocation6 [shape = 'u8[20480]{0}', space=vmem, size = 0x5000, scoped, tag = 'input window, operand 2, single buffered']
    #allocation7 [shape = 'u8[8192]{0}', space=vmem, size = 0x2000, scoped, tag = 'input window, operand 3, single buffered']
    #allocation8 [shape = 's32[1]{0}', space=sflag, size = 0x4, scoped, tag = 'scoped memory for tpu_custom_call.1']
    %9 = vsyncpa [#allocation3], 0
    %10 = vsyncpa [#allocation5], 0
    %11 = vsyncpa [#allocation8], 0
    // Predicated region
    $region2: #{tpu_custom_call.1} parent=1 // pred_check
      _
    $region3: #{tpu_custom_call.1} parent=1 // pred_check_branch
      %13 = sbr.rel (0) target = $region5
    $region4: #{tpu_custom_call.1} parent=1 // pred_region
      %s15 = ssub.s32 256, 256
      %16 = vsyncadd [#allocation3], %s15
      %s17 = sshll.u32 [#allocation2], 4
      %s18 = int_to_ptr.vmem [resolvable:$true] %s17
      %23 = dma.hbm_to_vmem [thread:$0]  %s0, 256, %s18, [#allocation3], 128, 128, 8
    $region5: #{tpu_custom_call.1} parent=1 // pred_fallthru
      _
    // Predicated region
    $region6: #{tpu_custom_call.1} parent=1 // pred_check
      _
    $region7: #{tpu_custom_call.1} parent=1 // pred_check_branch
      %25 = sbr.rel (0) target = $region9
    $region8: #{tpu_custom_call.1} parent=1 // pred_region
      %s27 = ssub.s32 1792, 1792
      %28 = vsyncadd [#allocation5], %s27
      %s29 = sshll.u32 [#allocation4], 4
      %s30 = int_to_ptr.vmem [resolvable:$true] %s29
      %35 = dma.hbm_to_vmem [thread:$0]  %s1, 1792, %s30, [#allocation5], 64, 64, 4
    $region9: #{tpu_custom_call.1} parent=1 // pred_fallthru
      _
    // Predicated region
    $region10: #{tpu_custom_call.1} parent=1 // pred_check
      _
    $region11: #{tpu_custom_call.1} parent=1 // pred_check_branch
      %37 = sbr.rel (0) target = $region13
    $region12: #{tpu_custom_call.1} parent=1 // pred_region
      %s39 = ssub.s32 640, 640
      %40 = vsyncadd [#allocation5], %s39
      %s41 = sshll.u32 [#allocation6], 4
      %s42 = int_to_ptr.vmem [resolvable:$true] %s41
      %47 = dma.hbm_to_vmem [thread:$0]  %s2, 640, %s42, [#allocation5], 128, 128, 8
    $region13: #{tpu_custom_call.1} parent=1 // pred_fallthru
      _
    // Predicated region
    $region14: #{tpu_custom_call.1} parent=1 // pred_check
      _
    $region15: #{tpu_custom_call.1} parent=1 // pred_check_branch
      %49 = sbr.rel (0) target = $region17
    $region16: #{tpu_custom_call.1} parent=1 // pred_region
      %s51 = ssub.s32 256, 256
      %52 = vsyncadd [#allocation8], %s51
      %s53 = sshll.u32 [#allocation7], 4
      %s54 = int_to_ptr.vmem [resolvable:$true] %s53
      %59 = dma.hbm_to_vmem [thread:$0]  %s3, 256, %s54, [#allocation8], 128, 128, 8
    $region17: #{tpu_custom_call.1} parent=1 // pred_fallthru
      _
    // Predicated region
    $region18: #{tpu_custom_call.1} parent=1 // pred_check
      _
    $region19: #{tpu_custom_call.1} parent=1 // pred_check_branch
      %61 = sbr.rel (0) target = $region21
    $region20: #{tpu_custom_call.1} parent=1 // pred_region
      %62 = dma.done [#allocation3], 256
    $region21: #{tpu_custom_call.1} parent=1 // pred_fallthru
      _
    // Predicated region
    $region22: #{tpu_custom_call.1} parent=1 // pred_check
      _
    $region23: #{tpu_custom_call.1} parent=1 // pred_check_branch
      %64 = sbr.rel (0) target = $region25
    $region24: #{tpu_custom_call.1} parent=1 // pred_region
      %65 = dma.done [#allocation5], 1792
    $region25: #{tpu_custom_call.1} parent=1 // pred_fallthru
      _
    // Predicated region
    $region26: #{tpu_custom_call.1} parent=1 // pred_check
      _
    $region27: #{tpu_custom_call.1} parent=1 // pred_check_branch
      %67 = sbr.rel (0) target = $region29
    $region28: #{tpu_custom_call.1} parent=1 // pred_region
      %68 = dma.done [#allocation5], 640
    $region29: #{tpu_custom_call.1} parent=1 // pred_fallthru
      _
    // Predicated region
    $region30: #{tpu_custom_call.1} parent=1 // pred_check
      _
    $region31: #{tpu_custom_call.1} parent=1 // pred_check_branch
      %70 = sbr.rel (0) target = $region33
    $region32: #{tpu_custom_call.1} parent=1 // pred_region
      %71 = dma.done [#allocation8], 256
    $region33: #{tpu_custom_call.1} parent=1 // pred_fallthru
      _
    %v73 = vld [vmem:[#allocation2] sm:$0xff]
    %v74 = vld [vmem:[#allocation2 + $0x8] sm:$0xff]
    %v75 = vld [vmem:[#allocation4] sm:$0xf]
    %v76 = vld [vmem:[#allocation4 + $0x4] sm:$0xf]
    %v77 = vld [vmem:[#allocation4 + $0x8] sm:$0xf]
    %v78 = vld [vmem:[#allocation4 + $0xc] sm:$0xf]
    %v79 = vld [vmem:[#allocation4 + $0x10] sm:$0xf]
    %v80 = vld [vmem:[#allocation4 + $0x14] sm:$0xf]
    %v81 = vld [vmem:[#allocation4 + $0x18] sm:$0xf]
    %v82 = vld [vmem:[#allocation4 + $0x1c] sm:$0xf]
    %v83 = vld [vmem:[#allocation4 + $0x20] sm:$0xf]
    %v84 = vld [vmem:[#allocation4 + $0x24] sm:$0xf]
    %v85 = vld [vmem:[#allocation4 + $0x28] sm:$0xf]
    %v86 = vld [vmem:[#allocation4 + $0x2c] sm:$0xf]
    %v87 = vld [vmem:[#allocation4 + $0x30] sm:$0xf]
    %v88 = vld [vmem:[#allocation4 + $0x34] sm:$0xf]
    %v89 = vld [vmem:[#allocation4 + $0x38] sm:$0xf]
    %v90 = vld [vmem:[#allocation4 + $0x3c] sm:$0xf]
    %v91 = vpack.c.bf16 %v74, %v73
    %v108 = vunpack.c.l.b16 %v75
    %v109 = vunpack.c.l.b16 %v76
    %v110 = vunpack.c.l.b16 %v77
    %v111 = vunpack.c.l.b16 %v78
    %v112 = vunpack.c.l.b16 %v79
    %v113 = vunpack.c.l.b16 %v80
    %v114 = vunpack.c.l.b16 %v81
    %v115 = vunpack.c.l.b16 %v82
    %v116 = vunpack.c.l.b16 %v83
    %v117 = vunpack.c.l.b16 %v84
    %v118 = vunpack.c.l.b16 %v85
    %v119 = vunpack.c.l.b16 %v86
    %v120 = vunpack.c.l.b16 %v87
    %v121 = vunpack.c.l.b16 %v88
    %v122 = vunpack.c.l.b16 %v89
    %v123 = vunpack.c.l.b16 %v90
    %v124 = vpack.c.b16 %v109, %v108
    %v125 = vpack.c.b16 %v111, %v110
    %v126 = vpack.c.b16 %v113, %v112
    %v127 = vpack.c.b16 %v115, %v114
    %v128 = vpack.c.b16 %v117, %v116
    %v129 = vpack.c.b16 %v119, %v118
    %v130 = vpack.c.b16 %v121, %v120
    %v131 = vpack.c.b16 %v123, %v122
    %140 = vmatprep.subr.bf16.mxu0 0
    %141 = vmatpush1.bf16.msra.mxu0 %v131
    %142 = vmatprep.subr.bf16.mxu0 0
    %143 = vmatpush1.bf16.msra.mxu0 %v130
    %144 = vmatprep.subr.bf16.mxu0 0
    %145 = vmatpush1.bf16.msra.mxu0 %v129
    %146 = vmatprep.subr.bf16.mxu0 0
    %147 = vmatpush1.bf16.msra.mxu0 %v128
    %148 = vmatprep.subr.bf16.mxu0 0
    %149 = vmatpush1.bf16.msra.mxu0 %v127
    %150 = vmatprep.subr.bf16.mxu0 0
    %151 = vmatpush1.bf16.msra.mxu0 %v126
    %152 = vmatprep.subr.bf16.mxu0 0
    %153 = vmatpush1.bf16.msra.mxu0 %v125
    %154 = vmatprep.subr.bf16.mxu0 0
    %155 = vmatpush1.bf16.msra.mxu0 %v124
    %156 = vmatprep.subr.bf16.mxu0 0
    %157 = vmatpush2.bf16.msra.mxu0 0
    %158 = vmatprep.subr.bf16.mxu0 0
    %159 = vmatpush2.bf16.msra.mxu0 0
    %160 = vmatprep.subr.bf16.mxu0 0
    %161 = vmatpush2.bf16.msra.mxu0 0
    %162 = vmatprep.subr.bf16.mxu0 0
    %163 = vmatpush2.bf16.msra.mxu0 0
    %164 = vmatprep.subr.bf16.mxu0 0
    %165 = vmatpush2.bf16.msra.mxu0 0
    %166 = vmatprep.subr.bf16.mxu0 0
    %167 = vmatpush2.bf16.msra.mxu0 0
    %168 = vmatprep.subr.bf16.mxu0 0
    %169 = vmatpush2.bf16.msra.mxu0 0
    %170 = vmatprep.subr.bf16.mxu0 0
    %171 = vmatpush2.bf16.msra.mxu0 0
    %172 = vmatprep.mubr.bf16.mxu0 0
    %173 = vmatmul.mubr.bf16.gmra.mxu0 %v91
    %v174 = vpop.f32.mrf.mxu0
    %v175 = vadd.f32 0.0, %v174
    %v176 = vpop.f32.mrf.mxu0
    %v177 = vpop.f32.mrf.mxu0
    %v178 = vadd.f32 0.0, %v177
    %v179 = vpop.f32.mrf.mxu0
    %180 = vdwg.mxu0
    %vm181 = vcmask 523264
    %v182 = vsel %vm181, %v175, 0.0
    %v183 = vsel %vm181, %v178, 0.0
    %v184 = vadd.f32 %v182, %v183
    %v185 = vrot.slane %v184, 4
    %v186 = vadd.f32 %v184, %v185
    %v187 = vrot.slane %v186, 2
    %v188 = vadd.f32 %v186, %v187
    %v189 = vrot.slane %v188, 1
    %v190 = vadd.f32 %v188, %v189
    %v191 = vrcp.pop 16.0
    %v192 = vmul.f32 %v190, %v191
    %v193 = vmul.f32 %v175, %v175
    %v194 = vmul.f32 %v178, %v178
    %v195 = vsel %vm181, %v193, 0.0
    %v196 = vsel %vm181, %v194, 0.0
    %v197 = vadd.f32 %v195, %v196
    %v198 = vrot.slane %v197, 4
    %v199 = vadd.f32 %v197, %v198
    %v200 = vrot.slane %v199, 2
    %v201 = vadd.f32 %v199, %v200
    %v202 = vrot.slane %v201, 1
    %v203 = vadd.f32 %v201, %v202
    %v204 = vmul.f32 %v203, %v191
    %v205 = vmul.f32 %v192, %v192
    %v206 = vsub.f32 %v204, %v205
    %v207 = vmax.f32 %v206, 0.0
    %v208 = vld [vmem:[#allocation7] sm:$0x1]
    %v209 = vld [vmem:[#allocation7 + $0x1] sm:$0x1]
    %v210 = vadd.f32 %v207, 1e-05
    %v211 = vrsqrt.pop %v210
    %v212 = vmul.f32 %v208, %v211
    %v213 = vmul.f32 %v192, %v212
    %v214 = vsub.f32 %v209, %v213
    %v215 = vlaneseq
    %v216 = vshrl.u32 %v215, 7
    %v217 = vsub.s32 0, %v216
    %v218 = vrot.slane %v212, %v217
    %v219 = vmul.f32 %v175, %v218
    %v220 = vmul.f32 %v178, %v218
    %v221 = vlaneseq
    %v222 = vshrl.u32 %v221, 7
    %v223 = vsub.s32 0, %v222
    %v224 = vrot.slane %v214, %v223
    %v225 = vadd.f32 %v219, %v224
    %v226 = vadd.f32 %v220, %v224
    %v227 = vmul.f32 %v225, 0.01
    %v228 = vmul.f32 %v226, 0.01
    %v229 = vmax.f32 %v225, %v227
    %v230 = vmax.f32 %v226, %v228
    %v231 = vld [vmem:[#allocation4 + $0x40] sm:$0xf]
    %v232 = vld [vmem:[#allocation4 + $0x44] sm:$0xf]
    %v233 = vld [vmem:[#allocation4 + $0x48] sm:$0xf]
    %v234 = vld [vmem:[#allocation4 + $0x4c] sm:$0xf]
    %v235 = vld [vmem:[#allocation4 + $0x50] sm:$0xf]
    %v236 = vld [vmem:[#allocation4 + $0x54] sm:$0xf]
    %v237 = vld [vmem:[#allocation4 + $0x58] sm:$0xf]
    %v238 = vld [vmem:[#allocation4 + $0x5c] sm:$0xf]
    %v239 = vpack.c.bf16 %v230, %v229
    %v248 = vunpack.c.l.b16 %v231
    %v249 = vunpack.c.l.b16 %v232
    %v250 = vunpack.c.l.b16 %v233
    %v251 = vunpack.c.l.b16 %v234
    %v252 = vunpack.c.l.b16 %v235
    %v253 = vunpack.c.l.b16 %v236
    %v254 = vunpack.c.l.b16 %v237
    %v255 = vunpack.c.l.b16 %v238
    %v256 = vpack.c.b16 %v249, %v248
    %v257 = vpack.c.b16 %v251, %v250
    %v258 = vpack.c.b16 %v253, %v252
    %v259 = vpack.c.b16 %v255, %v254
    %v265 = vsel %vm181, %v239, 0
    %267 = vmatprep.subr.bf16.mxu0 0
    %268 = vmatpush1.bf16.msra.mxu0 0
    %269 = vmatprep.subr.bf16.mxu0 0
    %270 = vmatpush1.bf16.msra.mxu0 0
    %271 = vmatprep.subr.bf16.mxu0 0
    %272 = vmatpush1.bf16.msra.mxu0 0
    %273 = vmatprep.subr.bf16.mxu0 0
    %274 = vmatpush1.bf16.msra.mxu0 0
    %275 = vmatprep.subr.bf16.mxu0 0
    %276 = vmatpush1.bf16.msra.mxu0 %v259
    %277 = vmatprep.subr.bf16.mxu0 0
    %278 = vmatpush1.bf16.msra.mxu0 %v258
    %279 = vmatprep.subr.bf16.mxu0 0
    %280 = vmatpush1.bf16.msra.mxu0 %v257
    %281 = vmatprep.subr.bf16.mxu0 0
    %282 = vmatpush1.bf16.msra.mxu0 %v256
    %283 = vmatprep.subr.bf16.mxu0 0
    %284 = vmatpush2.bf16.msra.mxu0 0
    %285 = vmatprep.subr.bf16.mxu0 0
    %286 = vmatpush2.bf16.msra.mxu0 0
    %287 = vmatprep.subr.bf16.mxu0 0
    %288 = vmatpush2.bf16.msra.mxu0 0
    %289 = vmatprep.subr.bf16.mxu0 0
    %290 = vmatpush2.bf16.msra.mxu0 0
    %291 = vmatprep.subr.bf16.mxu0 0
    %292 = vmatpush2.bf16.msra.mxu0 0
    %293 = vmatprep.subr.bf16.mxu0 0
    %294 = vmatpush2.bf16.msra.mxu0 0
    %295 = vmatprep.subr.bf16.mxu0 0
    %296 = vmatpush2.bf16.msra.mxu0 0
    %297 = vmatprep.subr.bf16.mxu0 0
    %298 = vmatpush2.bf16.msra.mxu0 0
    %299 = vmatprep.mubr.bf16.mxu0 0
    %300 = vmatmul.mubr.bf16.gmra.mxu0 %v265
    %v301 = vpop.f32.mrf.mxu0
    %v302 = vadd.f32 0.0, %v301
    %v303 = vpop.f32.mrf.mxu0
    %v304 = vpop.f32.mrf.mxu0
    %v305 = vadd.f32 0.0, %v304
    %v306 = vpop.f32.mrf.mxu0
    %307 = vdwg.mxu0
    %vm308 = vcmask 261120
    %v309 = vsel %vm308, %v302, 0.0
    %v310 = vsel %vm308, %v305, 0.0
    %v311 = vadd.f32 %v309, %v310
    %v312 = vrot.slane %v311, 4
    %v313 = vadd.f32 %v311, %v312
    %v314 = vrot.slane %v313, 2
    %v315 = vadd.f32 %v313, %v314
    %v316 = vrot.slane %v315, 1
    %v317 = vadd.f32 %v315, %v316
    %v318 = vmul.f32 %v317, %v191
    %v319 = vmul.f32 %v302, %v302
    %v320 = vmul.f32 %v305, %v305
    %v321 = vsel %vm308, %v319, 0.0
    %v322 = vsel %vm308, %v320, 0.0
    %v323 = vadd.f32 %v321, %v322
    %v324 = vrot.slane %v323, 4
    %v325 = vadd.f32 %v323, %v324
    %v326 = vrot.slane %v325, 2
    %v327 = vadd.f32 %v325, %v326
    %v328 = vrot.slane %v327, 1
    %v329 = vadd.f32 %v327, %v328
    %v330 = vmul.f32 %v329, %v191
    %v331 = vmul.f32 %v318, %v318
    %v332 = vsub.f32 %v330, %v331
    %v333 = vmax.f32 %v332, 0.0
    %v334 = vld [vmem:[#allocation7 + $0x2] sm:$0x1]
    %v335 = vld [vmem:[#allocation7 + $0x3] sm:$0x1]
    %v336 = vadd.f32 %v333, 1e-05
    %v337 = vrsqrt.pop %v336
    %v338 = vmul.f32 %v334, %v337
    %v339 = vmul.f32 %v318, %v338
    %v340 = vsub.f32 %v335, %v339
    %v341 = vlaneseq
    %v342 = vshrl.u32 %v341, 7
    %v343 = vsub.s32 0, %v342
    %v344 = vrot.slane %v338, %v343
    %v345 = vmul.f32 %v302, %v344
    %v346 = vmul.f32 %v305, %v344
    %v347 = vlaneseq
    %v348 = vshrl.u32 %v347, 7
    %v349 = vsub.s32 0, %v348
    %v350 = vrot.slane %v340, %v349
    %v351 = vadd.f32 %v345, %v350
    %v352 = vadd.f32 %v346, %v350
    %v353 = vmul.f32 %v351, 0.01
    %v354 = vmul.f32 %v352, 0.01
    %v355 = vmax.f32 %v351, %v353
    %v356 = vmax.f32 %v352, %v354
    %v357 = vld [vmem:[#allocation4 + $0x60] sm:$0xf]
    %v358 = vld [vmem:[#allocation4 + $0x64] sm:$0xf]
    %v359 = vld [vmem:[#allocation4 + $0x68] sm:$0xf]
    %v360 = vld [vmem:[#allocation4 + $0x6c] sm:$0xf]
    %v361 = vpack.c.bf16 %v356, %v355
    %v366 = vunpack.c.l.b16 %v357
    %v367 = vunpack.c.l.b16 %v358
    %v368 = vunpack.c.l.b16 %v359
    %v369 = vunpack.c.l.b16 %v360
    %v370 = vpack.c.b16 %v367, %v366
    %v371 = vpack.c.b16 %v369, %v368
    %v375 = vsel %vm308, %v361, 0
    %377 = vmatprep.subr.bf16.mxu0 0
    %378 = vmatpush1.bf16.msra.mxu0 0
    %379 = vmatprep.subr.bf16.mxu0 0
    %380 = vmatpush1.bf16.msra.mxu0 0
    %381 = vmatprep.subr.bf16.mxu0 0
    %382 = vmatpush1.bf16.msra.mxu0 0
    %383 = vmatprep.subr.bf16.mxu0 0
    %384 = vmatpush1.bf16.msra.mxu0 0
    %385 = vmatprep.subr.bf16.mxu0 0
    %386 = vmatpush1.bf16.msra.mxu0 0
    %387 = vmatprep.subr.bf16.mxu0 0
    %388 = vmatpush1.bf16.msra.mxu0 0
    %389 = vmatprep.subr.bf16.mxu0 0
    %390 = vmatpush1.bf16.msra.mxu0 %v371
    %391 = vmatprep.subr.bf16.mxu0 0
    %392 = vmatpush1.bf16.msra.mxu0 %v370
    %393 = vmatprep.subr.bf16.mxu0 0
    %394 = vmatpush2.bf16.msra.mxu0 0
    %395 = vmatprep.subr.bf16.mxu0 0
    %396 = vmatpush2.bf16.msra.mxu0 0
    %397 = vmatprep.subr.bf16.mxu0 0
    %398 = vmatpush2.bf16.msra.mxu0 0
    %399 = vmatprep.subr.bf16.mxu0 0
    %400 = vmatpush2.bf16.msra.mxu0 0
    %401 = vmatprep.subr.bf16.mxu0 0
    %402 = vmatpush2.bf16.msra.mxu0 0
    %403 = vmatprep.subr.bf16.mxu0 0
    %404 = vmatpush2.bf16.msra.mxu0 0
    %405 = vmatprep.subr.bf16.mxu0 0
    %406 = vmatpush2.bf16.msra.mxu0 0
    %407 = vmatprep.subr.bf16.mxu0 0
    %408 = vmatpush2.bf16.msra.mxu0 0
    %409 = vmatprep.mubr.bf16.mxu0 0
    %410 = vmatmul.mubr.bf16.gmra.mxu0 %v375
    %v411 = vpop.f32.mrf.mxu0
    %v412 = vadd.f32 0.0, %v411
    %v413 = vpop.f32.mrf.mxu0
    %v414 = vpop.f32.mrf.mxu0
    %v415 = vadd.f32 0.0, %v414
    %v416 = vpop.f32.mrf.mxu0
    %417 = vdwg.mxu0
    %vm418 = vcmask 130048
    %v419 = vsel %vm418, %v412, 0.0
    %v420 = vsel %vm418, %v415, 0.0
    %v421 = vadd.f32 %v419, %v420
    %v422 = vrot.slane %v421, 4
    %v423 = vadd.f32 %v421, %v422
    %v424 = vrot.slane %v423, 2
    %v425 = vadd.f32 %v423, %v424
    %v426 = vrot.slane %v425, 1
    %v427 = vadd.f32 %v425, %v426
    %v428 = vmul.f32 %v427, %v191
    %v429 = vmul.f32 %v412, %v412
    %v430 = vmul.f32 %v415, %v415
    %v431 = vsel %vm418, %v429, 0.0
    %v432 = vsel %vm418, %v430, 0.0
    %v433 = vadd.f32 %v431, %v432
    %v434 = vrot.slane %v433, 4
    %v435 = vadd.f32 %v433, %v434
    %v436 = vrot.slane %v435, 2
    %v437 = vadd.f32 %v435, %v436
    %v438 = vrot.slane %v437, 1
    %v439 = vadd.f32 %v437, %v438
    %v440 = vmul.f32 %v439, %v191
    %v441 = vmul.f32 %v428, %v428
    %v442 = vsub.f32 %v440, %v441
    %v443 = vmax.f32 %v442, 0.0
    %v444 = vld [vmem:[#allocation7 + $0x4] sm:$0x1]
    %v445 = vld [vmem:[#allocation7 + $0x5] sm:$0x1]
    %v446 = vadd.f32 %v443, 1e-05
    %v447 = vrsqrt.pop %v446
    %v448 = vmul.f32 %v444, %v447
    %v449 = vmul.f32 %v428, %v448
    %v450 = vsub.f32 %v445, %v449
    %v451 = vlaneseq
    %v452 = vshrl.u32 %v451, 7
    %v453 = vsub.s32 0, %v452
    %v454 = vrot.slane %v448, %v453
    %v455 = vmul.f32 %v412, %v454
    %v456 = vmul.f32 %v415, %v454
    %v457 = vlaneseq
    %v458 = vshrl.u32 %v457, 7
    %v459 = vsub.s32 0, %v458
    %v460 = vrot.slane %v450, %v459
    %v461 = vadd.f32 %v455, %v460
    %v462 = vadd.f32 %v456, %v460
    %v463 = vmul.f32 %v461, 0.01
    %v464 = vmul.f32 %v462, 0.01
    %v465 = vmax.f32 %v461, %v463
    %v466 = vmax.f32 %v462, %v464
    %v467 = vld [vmem:[#allocation6] sm:$0xff]
    %v468 = vld [vmem:[#allocation6 + $0x8] sm:$0xff]
    %470 = vset.pattern.permute.xlu0 0
    %471 = vperm.xlu0 %470, %v465
    %v472 = vpop.permute.xlu0 %471
    %475 = vset.pattern.permute.xlu0 0
    %476 = vperm.xlu0 %475, %v466
    %v477 = vpop.permute.xlu0 %476
    %v479 = vlaneseq
    %v480 = vshrl.u32 %v479, 7
    %v481 = vsub.s32 0, %v480
    %v482 = vrot.slane %v467, %v481
    %v483 = vmul.f32 %v472, %v482
    %v484 = vmul.f32 %v477, %v482
    %485 = vset.pattern.permute.xlu0 1
    %486 = vperm.xlu0 %485, %v465
    %v487 = vpop.permute.xlu0 %486
    %489 = vset.pattern.permute.xlu0 1
    %490 = vperm.xlu0 %489, %v466
    %v491 = vpop.permute.xlu0 %490
    %v493 = vlaneseq
    %v494 = vshrl.u32 %v493, 7
    %v495 = vsub.s32 1, %v494
    %v496 = vrot.slane %v467, %v495
    %v497 = vmul.f32 %v487, %v496
    %v498 = vmul.f32 %v491, %v496
    %v499 = vadd.f32 %v483, %v497
    %v500 = vadd.f32 %v484, %v498
    %501 = vset.pattern.permute.xlu0 2
    %502 = vperm.xlu0 %501, %v465
    %v503 = vpop.permute.xlu0 %502
    %505 = vset.pattern.permute.xlu0 2
    %506 = vperm.xlu0 %505, %v466
    %v507 = vpop.permute.xlu0 %506
    %v509 = vlaneseq
    %v510 = vshrl.u32 %v509, 7
    %v511 = vsub.s32 2, %v510
    %v512 = vrot.slane %v467, %v511
    %v513 = vmul.f32 %v503, %v512
    %v514 = vmul.f32 %v507, %v512
    %v515 = vadd.f32 %v499, %v513
    %v516 = vadd.f32 %v500, %v514
    %517 = vset.pattern.permute.xlu0 3
    %518 = vperm.xlu0 %517, %v465
    %v519 = vpop.permute.xlu0 %518
    %521 = vset.pattern.permute.xlu0 3
    %522 = vperm.xlu0 %521, %v466
    %v523 = vpop.permute.xlu0 %522
    %v525 = vlaneseq
    %v526 = vshrl.u32 %v525, 7
    %v527 = vsub.s32 3, %v526
    %v528 = vrot.slane %v467, %v527
    %v529 = vmul.f32 %v519, %v528
    %v530 = vmul.f32 %v523, %v528
    %v531 = vadd.f32 %v515, %v529
    %v532 = vadd.f32 %v516, %v530
    %533 = vset.pattern.permute.xlu0 4
    %534 = vperm.xlu0 %533, %v465
    %v535 = vpop.permute.xlu0 %534
    %537 = vset.pattern.permute.xlu0 4
    %538 = vperm.xlu0 %537, %v466
    %v539 = vpop.permute.xlu0 %538
    %v541 = vlaneseq
    %v542 = vshrl.u32 %v541, 7
    %v543 = vsub.s32 4, %v542
    %v544 = vrot.slane %v467, %v543
    %v545 = vmul.f32 %v535, %v544
    %v546 = vmul.f32 %v539, %v544
    %v547 = vadd.f32 %v531, %v545
    %v548 = vadd.f32 %v532, %v546
    %549 = vset.pattern.permute.xlu0 5
    %550 = vperm.xlu0 %549, %v465
    %v551 = vpop.permute.xlu0 %550
    %553 = vset.pattern.permute.xlu0 5
    %554 = vperm.xlu0 %553, %v466
    %v555 = vpop.permute.xlu0 %554
    %v557 = vlaneseq
    %v558 = vshrl.u32 %v557, 7
    %v559 = vsub.s32 5, %v558
    %v560 = vrot.slane %v467, %v559
    %v561 = vmul.f32 %v551, %v560
    %v562 = vmul.f32 %v555, %v560
    %v563 = vadd.f32 %v547, %v561
    %v564 = vadd.f32 %v548, %v562
    %565 = vset.pattern.permute.xlu0 6
    %566 = vperm.xlu0 %565, %v465
    %v567 = vpop.permute.xlu0 %566
    %569 = vset.pattern.permute.xlu0 6
    %570 = vperm.xlu0 %569, %v466
    %v571 = vpop.permute.xlu0 %570
    %v573 = vlaneseq
    %v574 = vshrl.u32 %v573, 7
    %v575 = vsub.s32 6, %v574
    %v576 = vrot.slane %v467, %v575
    %v577 = vmul.f32 %v567, %v576
    %v578 = vmul.f32 %v571, %v576
    %v579 = vadd.f32 %v563, %v577
    %v580 = vadd.f32 %v564, %v578
    %581 = vset.pattern.permute.xlu0 7
    %582 = vperm.xlu0 %581, %v465
    %v583 = vpop.permute.xlu0 %582
    %585 = vset.pattern.permute.xlu0 7
    %586 = vperm.xlu0 %585, %v466
    %v587 = vpop.permute.xlu0 %586
    %v589 = vlaneseq
    %v590 = vshrl.u32 %v589, 7
    %v591 = vsub.s32 7, %v590
    %v592 = vrot.slane %v467, %v591
    %v593 = vmul.f32 %v583, %v592
    %v594 = vmul.f32 %v587, %v592
    %v595 = vadd.f32 %v579, %v593
    %v596 = vadd.f32 %v580, %v594
    %597 = vset.pattern.permute.xlu0 8
    %598 = vperm.xlu0 %597, %v465
    %v599 = vpop.permute.xlu0 %598
    %601 = vset.pattern.permute.xlu0 8
    %602 = vperm.xlu0 %601, %v466
    %v603 = vpop.permute.xlu0 %602
    %v605 = vlaneseq
    %v606 = vshrl.u32 %v605, 7
    %v607 = vsub.s32 0, %v606
    %v608 = vrot.slane %v468, %v607
    %v609 = vmul.f32 %v599, %v608
    %v610 = vmul.f32 %v603, %v608
    %v611 = vadd.f32 %v595, %v609
    %v612 = vadd.f32 %v596, %v610
    %613 = vset.pattern.permute.xlu0 9
    %614 = vperm.xlu0 %613, %v465
    %v615 = vpop.permute.xlu0 %614
    %617 = vset.pattern.permute.xlu0 9
    %618 = vperm.xlu0 %617, %v466
    %v619 = vpop.permute.xlu0 %618
    %v621 = vlaneseq
    %v622 = vshrl.u32 %v621, 7
    %v623 = vsub.s32 1, %v622
    %v624 = vrot.slane %v468, %v623
    %v625 = vmul.f32 %v615, %v624
    %v626 = vmul.f32 %v619, %v624
    %v627 = vadd.f32 %v611, %v625
    %v628 = vadd.f32 %v612, %v626
    %629 = vset.pattern.permute.xlu0 10
    %630 = vperm.xlu0 %629, %v465
    %v631 = vpop.permute.xlu0 %630
    %633 = vset.pattern.permute.xlu0 10
    %634 = vperm.xlu0 %633, %v466
    %v635 = vpop.permute.xlu0 %634
    %v637 = vlaneseq
    %v638 = vshrl.u32 %v637, 7
    %v639 = vsub.s32 2, %v638
    %v640 = vrot.slane %v468, %v639
    %v641 = vmul.f32 %v631, %v640
    %v642 = vmul.f32 %v635, %v640
    %v643 = vadd.f32 %v627, %v641
    %v644 = vadd.f32 %v628, %v642
    %645 = vset.pattern.permute.xlu0 11
    %646 = vperm.xlu0 %645, %v465
    %v647 = vpop.permute.xlu0 %646
    %649 = vset.pattern.permute.xlu0 11
    %650 = vperm.xlu0 %649, %v466
    %v651 = vpop.permute.xlu0 %650
    %v653 = vlaneseq
    %v654 = vshrl.u32 %v653, 7
    %v655 = vsub.s32 3, %v654
    %v656 = vrot.slane %v468, %v655
    %v657 = vmul.f32 %v647, %v656
    %v658 = vmul.f32 %v651, %v656
    %v659 = vadd.f32 %v643, %v657
    %v660 = vadd.f32 %v644, %v658
    %661 = vset.pattern.permute.xlu0 12
    %662 = vperm.xlu0 %661, %v465
    %v663 = vpop.permute.xlu0 %662
    %665 = vset.pattern.permute.xlu0 12
    %666 = vperm.xlu0 %665, %v466
    %v667 = vpop.permute.xlu0 %666
    %v669 = vlaneseq
    %v670 = vshrl.u32 %v669, 7
    %v671 = vsub.s32 4, %v670
    %v672 = vrot.slane %v468, %v671
    %v673 = vmul.f32 %v663, %v672
    %v674 = vmul.f32 %v667, %v672
    %v675 = vadd.f32 %v659, %v673
    %v676 = vadd.f32 %v660, %v674
    %677 = vset.pattern.permute.xlu0 13
    %678 = vperm.xlu0 %677, %v465
    %v679 = vpop.permute.xlu0 %678
    %681 = vset.pattern.permute.xlu0 13
    %682 = vperm.xlu0 %681, %v466
    %v683 = vpop.permute.xlu0 %682
    %v685 = vlaneseq
    %v686 = vshrl.u32 %v685, 7
    %v687 = vsub.s32 5, %v686
    %v688 = vrot.slane %v468, %v687
    %v689 = vmul.f32 %v679, %v688
    %v690 = vmul.f32 %v683, %v688
    %v691 = vadd.f32 %v675, %v689
    %v692 = vadd.f32 %v676, %v690
    %693 = vset.pattern.permute.xlu0 14
    %694 = vperm.xlu0 %693, %v465
    %v695 = vpop.permute.xlu0 %694
    %697 = vset.pattern.permute.xlu0 14
    %698 = vperm.xlu0 %697, %v466
    %v699 = vpop.permute.xlu0 %698
    %v701 = vlaneseq
    %v702 = vshrl.u32 %v701, 7
    %v703 = vsub.s32 6, %v702
    %v704 = vrot.slane %v468, %v703
    %v705 = vmul.f32 %v695, %v704
    %v706 = vmul.f32 %v699, %v704
    %v707 = vadd.f32 %v691, %v705
    %v708 = vadd.f32 %v692, %v706
    %709 = vset.pattern.permute.xlu0 15
    %710 = vperm.xlu0 %709, %v465
    %v711 = vpop.permute.xlu0 %710
    %713 = vset.pattern.permute.xlu0 15
    %714 = vperm.xlu0 %713, %v466
    %v715 = vpop.permute.xlu0 %714
    %v717 = vlaneseq
    %v718 = vshrl.u32 %v717, 7
    %v719 = vsub.s32 7, %v718
    %v720 = vrot.slane %v468, %v719
    %v721 = vmul.f32 %v711, %v720
    %v722 = vmul.f32 %v715, %v720
    %v723 = vadd.f32 %v707, %v721
    %v724 = vadd.f32 %v708, %v722
    %vm725 = vcmask 64512
    %v726 = vsel %vm725, %v723, 0.0
    %v727 = vsel %vm725, %v724, 0.0
    %v728 = vadd.f32 %v726, %v727
    %v729 = vrot.slane %v728, 4
    %v730 = vadd.f32 %v728, %v729
    %v731 = vrot.slane %v730, 2
    %v732 = vadd.f32 %v730, %v731
    %v733 = vrot.slane %v732, 1
    %v734 = vadd.f32 %v732, %v733
    %v735 = vmul.f32 %v734, %v191
    %v736 = vmul.f32 %v723, %v723
    %v737 = vmul.f32 %v724, %v724
    %v738 = vsel %vm725, %v736, 0.0
    %v739 = vsel %vm725, %v737, 0.0
    %v740 = vadd.f32 %v738, %v739
    %v741 = vrot.slane %v740, 4
    %v742 = vadd.f32 %v740, %v741
    %v743 = vrot.slane %v742, 2
    %v744 = vadd.f32 %v742, %v743
    %v745 = vrot.slane %v744, 1
    %v746 = vadd.f32 %v744, %v745
    %v747 = vmul.f32 %v746, %v191
    %v748 = vmul.f32 %v735, %v735
    %v749 = vsub.f32 %v747, %v748
    %v750 = vmax.f32 %v749, 0.0
    %v751 = vld [vmem:[#allocation7 + $0x6] sm:$0x1]
    %v752 = vld [vmem:[#allocation7 + $0x7] sm:$0x1]
    %v753 = vadd.f32 %v750, 1e-05
    %v754 = vrsqrt.pop %v753
    %v755 = vmul.f32 %v751, %v754
    %v756 = vmul.f32 %v735, %v755
    %v757 = vsub.f32 %v752, %v756
    %v758 = vlaneseq
    %v759 = vshrl.u32 %v758, 7
    %v760 = vsub.s32 0, %v759
    %v761 = vrot.slane %v755, %v760
    %v762 = vmul.f32 %v723, %v761
    %v763 = vmul.f32 %v724, %v761
    %v764 = vlaneseq
    %v765 = vshrl.u32 %v764, 7
    %v766 = vsub.s32 0, %v765
    %v767 = vrot.slane %v757, %v766
    %v768 = vadd.f32 %v762, %v767
    %v769 = vadd.f32 %v763, %v767
    %v770 = vmul.f32 %v768, 0.01
    %v771 = vmul.f32 %v769, 0.01
    %v772 = vmax.f32 %v768, %v770
    %v773 = vmax.f32 %v769, %v771
    %v774 = vld [vmem:[#allocation6 + $0x10] sm:$0xff]
    %776 = vset.pattern.permute.xlu0 0
    %777 = vperm.xlu0 %776, %v772
    %v778 = vpop.permute.xlu0 %777
    %781 = vset.pattern.permute.xlu0 0
    %782 = vperm.xlu0 %781, %v773
    %v783 = vpop.permute.xlu0 %782
    %v785 = vlaneseq
    %v786 = vshrl.u32 %v785, 7
    %v787 = vsub.s32 0, %v786
    %v788 = vrot.slane %v774, %v787
    %v789 = vmul.f32 %v778, %v788
    %v790 = vmul.f32 %v783, %v788
    %791 = vset.pattern.permute.xlu0 1
    %792 = vperm.xlu0 %791, %v772
    %v793 = vpop.permute.xlu0 %792
    %795 = vset.pattern.permute.xlu0 1
    %796 = vperm.xlu0 %795, %v773
    %v797 = vpop.permute.xlu0 %796
    %v799 = vlaneseq
    %v800 = vshrl.u32 %v799, 7
    %v801 = vsub.s32 1, %v800
    %v802 = vrot.slane %v774, %v801
    %v803 = vmul.f32 %v793, %v802
    %v804 = vmul.f32 %v797, %v802
    %v805 = vadd.f32 %v789, %v803
    %v806 = vadd.f32 %v790, %v804
    %807 = vset.pattern.permute.xlu0 2
    %808 = vperm.xlu0 %807, %v772
    %v809 = vpop.permute.xlu0 %808
    %811 = vset.pattern.permute.xlu0 2
    %812 = vperm.xlu0 %811, %v773
    %v813 = vpop.permute.xlu0 %812
    %v815 = vlaneseq
    %v816 = vshrl.u32 %v815, 7
    %v817 = vsub.s32 2, %v816
    %v818 = vrot.slane %v774, %v817
    %v819 = vmul.f32 %v809, %v818
    %v820 = vmul.f32 %v813, %v818
    %v821 = vadd.f32 %v805, %v819
    %v822 = vadd.f32 %v806, %v820
    %823 = vset.pattern.permute.xlu0 3
    %824 = vperm.xlu0 %823, %v772
    %v825 = vpop.permute.xlu0 %824
    %827 = vset.pattern.permute.xlu0 3
    %828 = vperm.xlu0 %827, %v773
    %v829 = vpop.permute.xlu0 %828
    %v831 = vlaneseq
    %v832 = vshrl.u32 %v831, 7
    %v833 = vsub.s32 3, %v832
    %v834 = vrot.slane %v774, %v833
    %v835 = vmul.f32 %v825, %v834
    %v836 = vmul.f32 %v829, %v834
    %v837 = vadd.f32 %v821, %v835
    %v838 = vadd.f32 %v822, %v836
    %839 = vset.pattern.permute.xlu0 4
    %840 = vperm.xlu0 %839, %v772
    %v841 = vpop.permute.xlu0 %840
    %843 = vset.pattern.permute.xlu0 4
    %844 = vperm.xlu0 %843, %v773
    %v845 = vpop.permute.xlu0 %844
    %v847 = vlaneseq
    %v848 = vshrl.u32 %v847, 7
    %v849 = vsub.s32 4, %v848
    %v850 = vrot.slane %v774, %v849
    %v851 = vmul.f32 %v841, %v850
    %v852 = vmul.f32 %v845, %v850
    %v853 = vadd.f32 %v837, %v851
    %v854 = vadd.f32 %v838, %v852
    %855 = vset.pattern.permute.xlu0 5
    %856 = vperm.xlu0 %855, %v772
    %v857 = vpop.permute.xlu0 %856
    %859 = vset.pattern.permute.xlu0 5
    %860 = vperm.xlu0 %859, %v773
    %v861 = vpop.permute.xlu0 %860
    %v863 = vlaneseq
    %v864 = vshrl.u32 %v863, 7
    %v865 = vsub.s32 5, %v864
    %v866 = vrot.slane %v774, %v865
    %v867 = vmul.f32 %v857, %v866
    %v868 = vmul.f32 %v861, %v866
    %v869 = vadd.f32 %v853, %v867
    %v870 = vadd.f32 %v854, %v868
    %871 = vset.pattern.permute.xlu0 6
    %872 = vperm.xlu0 %871, %v772
    %v873 = vpop.permute.xlu0 %872
    %875 = vset.pattern.permute.xlu0 6
    %876 = vperm.xlu0 %875, %v773
    %v877 = vpop.permute.xlu0 %876
    %v879 = vlaneseq
    %v880 = vshrl.u32 %v879, 7
    %v881 = vsub.s32 6, %v880
    %v882 = vrot.slane %v774, %v881
    %v883 = vmul.f32 %v873, %v882
    %v884 = vmul.f32 %v877, %v882
    %v885 = vadd.f32 %v869, %v883
    %v886 = vadd.f32 %v870, %v884
    %887 = vset.pattern.permute.xlu0 7
    %888 = vperm.xlu0 %887, %v772
    %v889 = vpop.permute.xlu0 %888
    %891 = vset.pattern.permute.xlu0 7
    %892 = vperm.xlu0 %891, %v773
    %v893 = vpop.permute.xlu0 %892
    %v895 = vlaneseq
    %v896 = vshrl.u32 %v895, 7
    %v897 = vsub.s32 7, %v896
    %v898 = vrot.slane %v774, %v897
    %v899 = vmul.f32 %v889, %v898
    %v900 = vmul.f32 %v893, %v898
    %v901 = vadd.f32 %v885, %v899
    %v902 = vadd.f32 %v886, %v900
    %vm903 = vcmask 31744
    %v904 = vsel %vm903, %v901, 0.0
    %v905 = vsel %vm903, %v902, 0.0
    %v906 = vadd.f32 %v904, %v905
    %v907 = vrot.slane %v906, 4
    %v908 = vadd.f32 %v906, %v907
    %v909 = vrot.slane %v908, 2
    %v910 = vadd.f32 %v908, %v909
    %v911 = vrot.slane %v910, 1
    %v912 = vadd.f32 %v910, %v911
    %v913 = vmul.f32 %v912, %v191
    %v914 = vmul.f32 %v901, %v901
    %v915 = vmul.f32 %v902, %v902
    %v916 = vsel %vm903, %v914, 0.0
    %v917 = vsel %vm903, %v915, 0.0
    %v918 = vadd.f32 %v916, %v917
    %v919 = vrot.slane %v918, 4
    %v920 = vadd.f32 %v918, %v919
    %v921 = vrot.slane %v920, 2
    %v922 = vadd.f32 %v920, %v921
    %v923 = vrot.slane %v922, 1
    %v924 = vadd.f32 %v922, %v923
    %v925 = vmul.f32 %v924, %v191
    %v926 = vmul.f32 %v913, %v913
    %v927 = vsub.f32 %v925, %v926
    %v928 = vmax.f32 %v927, 0.0
    %v929 = vld [vmem:[#allocation7 + $0x8] sm:$0x1]
    %v930 = vld [vmem:[#allocation7 + $0x9] sm:$0x1]
    %v931 = vadd.f32 %v928, 1e-05
    %v932 = vrsqrt.pop %v931
    %v933 = vmul.f32 %v929, %v932
    %v934 = vmul.f32 %v913, %v933
    %v935 = vsub.f32 %v930, %v934
    %v936 = vlaneseq
    %v937 = vshrl.u32 %v936, 7
    %v938 = vsub.s32 0, %v937
    %v939 = vrot.slane %v933, %v938
    %v940 = vmul.f32 %v901, %v939
    %v941 = vmul.f32 %v902, %v939
    %v942 = vlaneseq
    %v943 = vshrl.u32 %v942, 7
    %v944 = vsub.s32 0, %v943
    %v945 = vrot.slane %v935, %v944
    %v946 = vadd.f32 %v940, %v945
    %v947 = vadd.f32 %v941, %v945
    %v948 = vmul.f32 %v946, 0.01
    %v949 = vmul.f32 %v947, 0.01
    %v950 = vmax.f32 %v946, %v948
    %v951 = vmax.f32 %v947, %v949
    %v952 = vld [vmem:[#allocation6 + $0x18] sm:$0xf]
    %954 = vset.pattern.permute.xlu0 0
    %955 = vperm.xlu0 %954, %v950
    %v956 = vpop.permute.xlu0 %955
    %959 = vset.pattern.permute.xlu0 0
    %960 = vperm.xlu0 %959, %v951
    %v961 = vpop.permute.xlu0 %960
    %v963 = vlaneseq
    %v964 = vshrl.u32 %v963, 7
    %v965 = vsub.s32 0, %v964
    %v966 = vrot.slane %v952, %v965
    %v967 = vmul.f32 %v956, %v966
    %v968 = vmul.f32 %v961, %v966
    %969 = vset.pattern.permute.xlu0 1
    %970 = vperm.xlu0 %969, %v950
    %v971 = vpop.permute.xlu0 %970
    %973 = vset.pattern.permute.xlu0 1
    %974 = vperm.xlu0 %973, %v951
    %v975 = vpop.permute.xlu0 %974
    %v977 = vlaneseq
    %v978 = vshrl.u32 %v977, 7
    %v979 = vsub.s32 1, %v978
    %v980 = vrot.slane %v952, %v979
    %v981 = vmul.f32 %v971, %v980
    %v982 = vmul.f32 %v975, %v980
    %v983 = vadd.f32 %v967, %v981
    %v984 = vadd.f32 %v968, %v982
    %985 = vset.pattern.permute.xlu0 2
    %986 = vperm.xlu0 %985, %v950
    %v987 = vpop.permute.xlu0 %986
    %989 = vset.pattern.permute.xlu0 2
    %990 = vperm.xlu0 %989, %v951
    %v991 = vpop.permute.xlu0 %990
    %v993 = vlaneseq
    %v994 = vshrl.u32 %v993, 7
    %v995 = vsub.s32 2, %v994
    %v996 = vrot.slane %v952, %v995
    %v997 = vmul.f32 %v987, %v996
    %v998 = vmul.f32 %v991, %v996
    %v999 = vadd.f32 %v983, %v997
    %v1000 = vadd.f32 %v984, %v998
    %1001 = vset.pattern.permute.xlu0 3
    %1002 = vperm.xlu0 %1001, %v950
    %v1003 = vpop.permute.xlu0 %1002
    %1005 = vset.pattern.permute.xlu0 3
    %1006 = vperm.xlu0 %1005, %v951
    %v1007 = vpop.permute.xlu0 %1006
    %v1009 = vlaneseq
    %v1010 = vshrl.u32 %v1009, 7
    %v1011 = vsub.s32 3, %v1010
    %v1012 = vrot.slane %v952, %v1011
    %v1013 = vmul.f32 %v1003, %v1012
    %v1014 = vmul.f32 %v1007, %v1012
    %v1015 = vadd.f32 %v999, %v1013
    %v1016 = vadd.f32 %v1000, %v1014
    %vm1017 = vcmask 15360
    %v1018 = vsel %vm1017, %v1015, 0.0
    %v1019 = vsel %vm1017, %v1016, 0.0
    %v1020 = vadd.f32 %v1018, %v1019
    %v1021 = vrot.slane %v1020, 4
    %v1022 = vadd.f32 %v1020, %v1021
    %v1023 = vrot.slane %v1022, 2
    %v1024 = vadd.f32 %v1022, %v1023
    %v1025 = vrot.slane %v1024, 1
    %v1026 = vadd.f32 %v1024, %v1025
    %v1027 = vmul.f32 %v1026, %v191
    %v1028 = vmul.f32 %v1015, %v1015
    %v1029 = vmul.f32 %v1016, %v1016
    %v1030 = vsel %vm1017, %v1028, 0.0
    %v1031 = vsel %vm1017, %v1029, 0.0
    %v1032 = vadd.f32 %v1030, %v1031
    %v1033 = vrot.slane %v1032, 4
    %v1034 = vadd.f32 %v1032, %v1033
    %v1035 = vrot.slane %v1034, 2
    %v1036 = vadd.f32 %v1034, %v1035
    %v1037 = vrot.slane %v1036, 1
    %v1038 = vadd.f32 %v1036, %v1037
    %v1039 = vmul.f32 %v1038, %v191
    %v1040 = vmul.f32 %v1027, %v1027
    %v1041 = vsub.f32 %v1039, %v1040
    %v1042 = vmax.f32 %v1041, 0.0
    %v1043 = vld [vmem:[#allocation7 + $0xa] sm:$0x1]
    %v1044 = vld [vmem:[#allocation7 + $0xb] sm:$0x1]
    %v1045 = vadd.f32 %v1042, 1e-05
    %v1046 = vrsqrt.pop %v1045
    %v1047 = vmul.f32 %v1043, %v1046
    %v1048 = vmul.f32 %v1027, %v1047
    %v1049 = vsub.f32 %v1044, %v1048
    %v1050 = vlaneseq
    %v1051 = vshrl.u32 %v1050, 7
    %v1052 = vsub.s32 0, %v1051
    %v1053 = vrot.slane %v1047, %v1052
    %v1054 = vmul.f32 %v1015, %v1053
    %v1055 = vmul.f32 %v1016, %v1053
    %v1056 = vlaneseq
    %v1057 = vshrl.u32 %v1056, 7
    %v1058 = vsub.s32 0, %v1057
    %v1059 = vrot.slane %v1049, %v1058
    %v1060 = vadd.f32 %v1054, %v1059
    %v1061 = vadd.f32 %v1055, %v1059
    %v1062 = vmul.f32 %v1060, 0.01
    %v1063 = vmul.f32 %v1061, 0.01
    %v1064 = vmax.f32 %v1060, %v1062
    %v1065 = vmax.f32 %v1061, %v1063
    %v1066 = vld [vmem:[#allocation6 + $0x20] sm:$0x3]
    %v1067 = vld [vmem:[#allocation7 + $0xc] sm:$0x1]
    %v1068 = vlaneseq
    %v1069 = vshrl.u32 %v1068, 7
    %v1070 = vsub.s32 0, %v1069
    %v1071 = vrot.slane %v1066, %v1070
    %v1072 = vmul.f32 %v1064, %v1071
    %v1073 = vmul.f32 %v1065, %v1071
    %v1074 = vlaneseq
    %v1075 = vshrl.u32 %v1074, 7
    %v1076 = vsub.s32 1, %v1075
    %v1077 = vrot.slane %v1066, %v1076
    %1079 = vrot.lane.b32.xlu0 %v1077, 1
    %v1080 = vpop.permute.xlu0 %1079
    %v1082 = vmul.f32 %v1064, %v1080
    %v1083 = vmul.f32 %v1065, %v1080
    %1086 = vrot.lane.b32.xlu0 %v1082, 127
    %v1087 = vpop.permute.xlu0 %1086
    %1088 = vrot.lane.b32.xlu0 %v1083, 127
    %v1089 = vpop.permute.xlu0 %1088
    %v1092 = vadd.f32 %v1072, %v1087
    %v1093 = vadd.f32 %v1073, %v1089
    %v1094 = vlaneseq
    %v1095 = vshrl.u32 %v1094, 7
    %v1096 = vsub.s32 0, %v1095
    %v1097 = vrot.slane %v1067, %v1096
    %v1098 = vadd.f32 %v1092, %v1097
    %v1099 = vadd.f32 %v1093, %v1097
    %vm1100 = vcmask 7168
    %1101 = vst.msk [vmem:[%s4] sm:$0xff] %vm1100, %v1098
    %1102 = vst.msk [vmem:[%s4 + $0x8] sm:$0xff] %vm1100, %v1099
    // Predicated region
    $region34: #{tpu_custom_call.1} parent=1 // pred_check
      _
    $region35: #{tpu_custom_call.1} parent=1 // pred_check_branch
      %1104 = sbr.rel (0) target = $region37
    $region36: #{tpu_custom_call.1} parent=1 // pred_region
      _
    $region37: #{tpu_custom_call.1} parent=1 // pred_fallthru
      _
    // Predicated region
    $region38: #{tpu_custom_call.1} parent=1 // pred_check
      _
    $region39: #{tpu_custom_call.1} parent=1 // pred_check_branch
      %1106 = sbr.rel (0) target = $region41
    $region40: #{tpu_custom_call.1} parent=1 // pred_region
      _
    $region41: #{tpu_custom_call.1} parent=1 // pred_fallthru
      _
    %1107 = vsyncpa [#allocation3], 1
    %1108 = vsyncpa [#allocation5], 1
    %1109 = vsyncpa [#allocation8], 1

</llo_original>
